<compile_context>
chip_gen: v5e
topology: v5e:2x2
jax: 0.10.0
libtpu: 0.0.40
codegen_flags: <defaults>
</compile_context>

<pallas_src>
import functools

import jax
import jax.numpy as jnp
from jax.experimental import pallas as pl
from jax.experimental.pallas import tpu as pltpu

D_IN = 784           # 28*28 flattened MNIST image
D_PAD = 896          # 7*128: lane-dense padding of the decoder output
H1 = 256


def _round_up(x, m):
    return (x + m - 1) // m * m


# ----------------------------------------------------------------------------
# Kernel: one batch tile, all four layers fused (MXU dots, VPU relu, EUP exp).
# ----------------------------------------------------------------------------
def autoencoder_kernel(x_ref,
                       w1_ref, b1_ref,
                       w2_ref, b2_ref,
                       w3_ref, b3_ref,
                       w4_ref, b4_ref,
                       enc_ref, dec_ref):
    # x arrives un-padded f32; cast to bf16 in-kernel for the MXU (no extra
    # HBM pass in the wrapper).
    x = x_ref[...].astype(jnp.bfloat16)                          # (bm, 784)

    # ---- encoder ----
    h1 = jnp.dot(x, w1_ref[...], preferred_element_type=jnp.float32)
    h1 = jnp.maximum(h1 + b1_ref[...], 0.0)                      # (bm, 256) f32

    z = jnp.dot(h1.astype(jnp.bfloat16), w2_ref[...],
                preferred_element_type=jnp.float32)
    z = jnp.maximum(z + b2_ref[...], 0.0)                        # (bm, H_PAD) f32
    # padded columns (>= hidden) are relu(0 + 0) = 0
    enc_ref[...] = z.astype(enc_ref.dtype)

    # ---- decoder ----
    h2 = jnp.dot(z.astype(jnp.bfloat16), w3_ref[...],
                 preferred_element_type=jnp.float32)
    h2 = jnp.maximum(h2 + b3_ref[...], 0.0)                      # (bm, 256) f32

    logits = jnp.dot(h2.astype(jnp.bfloat16), w4_ref[...],
                     preferred_element_type=jnp.float32)
    logits = logits + b4_ref[...]                                # (bm, 896) f32

    # sigmoid = 1 / (1 + exp(-x)); exp on the EUP, divide replaced by the
    # EUP approximate reciprocal -> VALU stays free (matters most on v5e).
    dec = pl.reciprocal(1.0 + jnp.exp(-logits), approx=True)
    # padded columns (>= 784) hold sigmoid(0) = 0.5 (documented garbage)
    dec_ref[...] = dec.astype(dec_ref.dtype)


# ----------------------------------------------------------------------------
# One-time weight preparation: pre-transposed (in, out), zero-padded to
# lane-aligned output shapes, cast to bf16 (biases stay f32).
# ----------------------------------------------------------------------------
def prepare_params(params, *, hidden):
    h_pad = max(_round_up(hidden, 128), 128)

    w1_p = params["w1"].astype(jnp.bfloat16)                             # (784, 256)
    w2_p = jnp.zeros((H1, h_pad), jnp.bfloat16).at[:, :hidden].set(
        params["w2"].astype(jnp.bfloat16))
    w3_p = jnp.zeros((h_pad, H1), jnp.bfloat16).at[:hidden, :].set(
        params["w3"].astype(jnp.bfloat16))
    w4_p = jnp.zeros((H1, D_PAD), jnp.bfloat16).at[:, :D_IN].set(
        params["w4"].astype(jnp.bfloat16))

    b1_p = params["b1"].astype(jnp.float32)                              # (1, 256)
    b2_p = jnp.zeros((1, h_pad), jnp.float32).at[:, :hidden].set(
        params["b2"].astype(jnp.float32))
    b3_p = params["b3"].astype(jnp.float32)                              # (1, 256)
    b4_p = jnp.zeros((1, D_PAD), jnp.float32).at[:, :D_IN].set(
        params["b4"].astype(jnp.float32))

    return dict(w1=w1_p, b1=b1_p, w2=w2_p, b2=b2_p,
                w3=w3_p, b3=b3_p, w4=w4_p, b4=b4_p)


# ----------------------------------------------------------------------------
# Hot-path forward: returns padded bf16 outputs straight from the kernel.
#   encoded: (B, H_PAD)  -- columns >= hidden are zero
#   decoded: (B, D_PAD)  -- columns >= 784 are 0.5
# ----------------------------------------------------------------------------
@functools.partial(jax.jit, static_argnames=("block_m",))
def autoencoder_forward_padded(x, padded_params, *, block_m=1024):
    B, d_in = x.shape
    assert d_in == D_IN

    w1, b1 = padded_params["w1"], padded_params["b1"]
    w2, b2 = padded_params["w2"], padded_params["b2"]
    w3, b3 = padded_params["w3"], padded_params["b3"]
    w4, b4 = padded_params["w4"], padded_params["b4"]
    h_pad = w2.shape[1]

    # Batch tile: big (default 1024 rows) to amortize the grid-step overhead,
    # multiple of 16 so bf16 output blocks are sublane-tileable, and split
    # into >= 2 grid steps when possible so both TensorCores get work on v7x.
    if B <= 16:
        bm = B
    else:
        bm = min(block_m, _round_up(B, 16))
        if pl.cdiv(B, bm) == 1:
            bm = _round_up(pl.cdiv(B, 2), 16)
    grid = (pl.cdiv(B, bm),)

    def resident(arr):
        # Whole array, constant index_map -> DMA'd once, VMEM-resident.
        return pl.BlockSpec(arr.shape, lambda i: (0, 0))

    in_specs = [
        pl.BlockSpec((bm, D_IN), lambda i: (i, 0)),      # x tile, un-padded f32
        resident(w1), resident(b1),
        resident(w2), resident(b2),
        resident(w3), resident(b3),
        resident(w4), resident(b4),
    ]
    out_specs = [
        pl.BlockSpec((bm, h_pad), lambda i: (i, 0)),     # encoded (padded, bf16)
        pl.BlockSpec((bm, D_PAD), lambda i: (i, 0)),     # decoded (padded, bf16)
    ]
    out_shape = (
        jax.ShapeDtypeStruct((B, h_pad), jnp.bfloat16),
        jax.ShapeDtypeStruct((B, D_PAD), jnp.bfloat16),
    )

    return pl.pallas_call(
        autoencoder_kernel,
        grid_spec=pltpu.PrefetchScalarGridSpec(
            num_scalar_prefetch=0,
            grid=grid,
            in_specs=in_specs,
            out_specs=out_specs,
        ),
        out_shape=out_shape,
        compiler_params=pltpu.CompilerParams(
            dimension_semantics=("parallel",),
            vmem_limit_bytes=48 * 1024 * 1024,
        ),
    )(x, w1, b1, w2, b2, w3, b3, w4, b4)


def autoencoder_forward(x, padded_params, *, hidden, block_m=1024):
    """PyTorch-shape forward: (encoded (B,hidden) f32, decoded (B,784) f32).

    The slice/cast here is a convenience copy for consumers that need the
    exact nn.Module shapes; performance-critical callers should consume the
    padded bf16 outputs of `autoencoder_forward_padded` directly.
    """
    enc_p, dec_p = autoencoder_forward_padded(x, padded_params, block_m=block_m)
    B = x.shape[0]
    return (enc_p[:B, :hidden].astype(jnp.float32),
            dec_p[:B, :D_IN].astype(jnp.float32))


# ----------------------------------------------------------------------------
# Init + pure-JAX reference.
# ----------------------------------------------------------------------------
def init_params(key, hidden=8):
    """Matches nn.Linear's default U(-1/sqrt(fan_in), +1/sqrt(fan_in)) init,
    stored pre-transposed as (in, out)."""
    dims = [(D_IN, H1), (H1, hidden), (hidden, H1), (H1, D_IN)]
    params = {}
    for idx, (fan_in, fan_out) in enumerate(dims, start=1):
        key, kw, kb = jax.random.split(key, 3)
        bound = 1.0 / (fan_in ** 0.5)
        params[f"w{idx}"] = jax.random.uniform(
            kw, (fan_in, fan_out), jnp.float32, -bound, bound)
        params[f"b{idx}"] = jax.random.uniform(
            kb, (1, fan_out), jnp.float32, -bound, bound)
    return params


def reference_forward(x, params):
    h1 = jnp.maximum(x @ params["w1"] + params["b1"], 0.0)
    z = jnp.maximum(h1 @ params["w2"] + params["b2"], 0.0)
    h2 = jnp.maximum(z @ params["w3"] + params["b3"], 0.0)
    dec = jax.nn.sigmoid(h2 @ params["w4"] + params["b4"])
    return z, dec


if __name__ == "__main__":
    key = jax.random.PRNGKey(0)
    key, kx = jax.random.split(key)

    hidden = 8
    batch = 32  # module's default batch_size
    # synthetic "MNIST" batch: values in [0, 1], flattened 28x28 images
    x = jax.random.uniform(kx, (batch, D_IN), jnp.float32, 0.0, 1.0)

    params = init_params(key, hidden=hidden)
    padded_params = prepare_params(params, hidden=hidden)

    encoded, decoded = autoencoder_forward(x, padded_params, hidden=hidden)
    encoded = jax.block_until_ready(encoded)
    decoded = jax.block_until_ready(decoded)

    # sanity check against a pure-f32 JAX reference (bf16 matmul/output tol.)
    enc_ref, dec_ref = reference_forward(x, params)
    assert encoded.shape == (batch, hidden)
    assert decoded.shape == (batch, D_IN)
    assert jnp.allclose(encoded, enc_ref, atol=3e-2, rtol=3e-2)
    assert jnp.allclose(decoded, dec_ref, atol=3e-2, rtol=3e-2)

    print("KERNEL_OK")
</pallas_src>

<mosaic_0001>
module attributes {stable_mosaic.version = 11 : i64} {
  func.func @autoencoder_kernel(%arg0: i32, %arg1: memref<16x784xf32, #tpu.memory_space<vmem>>, %arg2: memref<784x256xbf16, #tpu.memory_space<vmem>>, %arg3: memref<1x256xf32, #tpu.memory_space<vmem>>, %arg4: memref<256x128xbf16, #tpu.memory_space<vmem>>, %arg5: memref<1x128xf32, #tpu.memory_space<vmem>>, %arg6: memref<128x256xbf16, #tpu.memory_space<vmem>>, %arg7: memref<1x256xf32, #tpu.memory_space<vmem>>, %arg8: memref<256x896xbf16, #tpu.memory_space<vmem>>, %arg9: memref<1x896xf32, #tpu.memory_space<vmem>>, %arg10: memref<16x128xbf16, #tpu.memory_space<vmem>>, %arg11: memref<16x896xbf16, #tpu.memory_space<vmem>>) attributes {dimension_semantics = [#tpu.dimension_semantics<parallel>], iteration_bounds = array<i64: 2>, scalar_prefetch = 0 : i64, scratch_operands = 0 : i64, tpu.core_type = #tpu.core_type<tc>, window_params = [{transform_indices = @transform_0, window_bounds = array<i64: 16, 784>}, {pipeline_mode = #tpu.pipeline_mode<synchronous>, transform_indices = @transform_1, window_bounds = array<i64: 784, 256>}, {pipeline_mode = #tpu.pipeline_mode<synchronous>, transform_indices = @transform_2, window_bounds = array<i64: 1, 256>}, {pipeline_mode = #tpu.pipeline_mode<synchronous>, transform_indices = @transform_3, window_bounds = array<i64: 256, 128>}, {pipeline_mode = #tpu.pipeline_mode<synchronous>, transform_indices = @transform_4, window_bounds = array<i64: 1, 128>}, {pipeline_mode = #tpu.pipeline_mode<synchronous>, transform_indices = @transform_5, window_bounds = array<i64: 128, 256>}, {pipeline_mode = #tpu.pipeline_mode<synchronous>, transform_indices = @transform_6, window_bounds = array<i64: 1, 256>}, {pipeline_mode = #tpu.pipeline_mode<synchronous>, transform_indices = @transform_7, window_bounds = array<i64: 256, 896>}, {pipeline_mode = #tpu.pipeline_mode<synchronous>, transform_indices = @transform_8, window_bounds = array<i64: 1, 896>}, {transform_indices = @transform_9, window_bounds = array<i64: 16, 128>}, {transform_indices = @transform_10, window_bounds = array<i64: 16, 896>}]} {
    %c0 = arith.constant 0 : index
    %c0_0 = arith.constant 0 : index
    %0 = vector.load %arg1[%c0, %c0_0] : memref<16x784xf32, #tpu.memory_space<vmem>>, vector<16x784xf32>
    %1 = arith.truncf %0 : vector<16x784xf32> to vector<16x784xbf16>
    %c0_1 = arith.constant 0 : index
    %c0_2 = arith.constant 0 : index
    %2 = vector.load %arg2[%c0_1, %c0_2] : memref<784x256xbf16, #tpu.memory_space<vmem>>, vector<784x256xbf16>
    %cst = arith.constant dense<0.000000e+00> : vector<16x256xf32>
    %3 = tpu.matmul %1, %2, %cst {dimension_numbers = #tpu.dot_dimension_numbers<[1], [0], [0], [1], [0, 0, 1, 1], [], []>} : vector<16x784xbf16>, vector<784x256xbf16>, vector<16x256xf32> -> vector<16x256xf32>
    %c0_3 = arith.constant 0 : index
    %c0_4 = arith.constant 0 : index
    %4 = vector.load %arg3[%c0_3, %c0_4] : memref<1x256xf32, #tpu.memory_space<vmem>>, vector<1x256xf32>
    %5 = vector.broadcast %4 : vector<1x256xf32> to vector<16x256xf32>
    %6 = arith.addf %3, %5 : vector<16x256xf32>
    %cst_5 = arith.constant 0.000000e+00 : f32
    %7 = vector.broadcast %cst_5 : f32 to vector<16x256xf32>
    %8 = arith.maximumf %6, %7 : vector<16x256xf32>
    %9 = arith.truncf %8 : vector<16x256xf32> to vector<16x256xbf16>
    %c0_6 = arith.constant 0 : index
    %c0_7 = arith.constant 0 : index
    %10 = vector.load %arg4[%c0_6, %c0_7] : memref<256x128xbf16, #tpu.memory_space<vmem>>, vector<256x128xbf16>
    %cst_8 = arith.constant dense<0.000000e+00> : vector<16x128xf32>
    %11 = tpu.matmul %9, %10, %cst_8 {dimension_numbers = #tpu.dot_dimension_numbers<[1], [0], [0], [1], [0, 0, 1, 1], [], []>} : vector<16x256xbf16>, vector<256x128xbf16>, vector<16x128xf32> -> vector<16x128xf32>
    %c0_9 = arith.constant 0 : index
    %c0_10 = arith.constant 0 : index
    %12 = vector.load %arg5[%c0_9, %c0_10] : memref<1x128xf32, #tpu.memory_space<vmem>>, vector<1x128xf32>
    %13 = vector.broadcast %12 : vector<1x128xf32> to vector<16x128xf32>
    %14 = arith.addf %11, %13 : vector<16x128xf32>
    %cst_11 = arith.constant 0.000000e+00 : f32
    %15 = vector.broadcast %cst_11 : f32 to vector<16x128xf32>
    %16 = arith.maximumf %14, %15 : vector<16x128xf32>
    %17 = arith.truncf %16 : vector<16x128xf32> to vector<16x128xbf16>
    %c0_12 = arith.constant 0 : index
    %c0_13 = arith.constant 0 : index
    %18 = vector.load %arg10[%c0_12, %c0_13] : memref<16x128xbf16, #tpu.memory_space<vmem>>, vector<16x128xbf16>
    tpu.vector_store %arg10[%c0_12, %c0_13], %17 {strides = array<i32>} : memref<16x128xbf16, #tpu.memory_space<vmem>>, vector<16x128xbf16>,
    %19 = arith.truncf %16 : vector<16x128xf32> to vector<16x128xbf16>
    %c0_14 = arith.constant 0 : index
    %c0_15 = arith.constant 0 : index
    %20 = vector.load %arg6[%c0_14, %c0_15] : memref<128x256xbf16, #tpu.memory_space<vmem>>, vector<128x256xbf16>
    %cst_16 = arith.constant dense<0.000000e+00> : vector<16x256xf32>
    %21 = tpu.matmul %19, %20, %cst_16 {dimension_numbers = #tpu.dot_dimension_numbers<[1], [0], [0], [1], [0, 0, 1, 1], [], []>} : vector<16x128xbf16>, vector<128x256xbf16>, vector<16x256xf32> -> vector<16x256xf32>
    %c0_17 = arith.constant 0 : index
    %c0_18 = arith.constant 0 : index
    %22 = vector.load %arg7[%c0_17, %c0_18] : memref<1x256xf32, #tpu.memory_space<vmem>>, vector<1x256xf32>
    %23 = vector.broadcast %22 : vector<1x256xf32> to vector<16x256xf32>
    %24 = arith.addf %21, %23 : vector<16x256xf32>
    %cst_19 = arith.constant 0.000000e+00 : f32
    %25 = vector.broadcast %cst_19 : f32 to vector<16x256xf32>
    %26 = arith.maximumf %24, %25 : vector<16x256xf32>
    %27 = arith.truncf %26 : vector<16x256xf32> to vector<16x256xbf16>
    %c0_20 = arith.constant 0 : index
    %c0_21 = arith.constant 0 : index
    %28 = vector.load %arg8[%c0_20, %c0_21] : memref<256x896xbf16, #tpu.memory_space<vmem>>, vector<256x896xbf16>
    %cst_22 = arith.constant dense<0.000000e+00> : vector<16x896xf32>
    %29 = tpu.matmul %27, %28, %cst_22 {dimension_numbers = #tpu.dot_dimension_numbers<[1], [0], [0], [1], [0, 0, 1, 1], [], []>} : vector<16x256xbf16>, vector<256x896xbf16>, vector<16x896xf32> -> vector<16x896xf32>
    %c0_23 = arith.constant 0 : index
    %c0_24 = arith.constant 0 : index
    %30 = vector.load %arg9[%c0_23, %c0_24] : memref<1x896xf32, #tpu.memory_space<vmem>>, vector<1x896xf32>
    %31 = vector.broadcast %30 : vector<1x896xf32> to vector<16x896xf32>
    %32 = arith.addf %29, %31 : vector<16x896xf32>
    %cst_25 = arith.constant 0.000000e+00 : f32
    %33 = vector.broadcast %cst_25 : f32 to vector<16x896xf32>
    %34 = arith.subf %33, %32 : vector<16x896xf32>
    %35 = math.exp %34 : vector<16x896xf32>
    %cst_26 = arith.constant 1.000000e+00 : f32
    %36 = vector.broadcast %cst_26 : f32 to vector<16x896xf32>
    %37 = arith.addf %36, %35 : vector<16x896xf32>
    %38 = tpu.reciprocal %37 {approx = true} : vector<16x896xf32> -> vector<16x896xf32>
    %39 = arith.truncf %38 : vector<16x896xf32> to vector<16x896xbf16>
    %c0_27 = arith.constant 0 : index
    %c0_28 = arith.constant 0 : index
    %40 = vector.load %arg11[%c0_27, %c0_28] : memref<16x896xbf16, #tpu.memory_space<vmem>>, vector<16x896xbf16>
    tpu.vector_store %arg11[%c0_27, %c0_28], %39 {strides = array<i32>} : memref<16x896xbf16, #tpu.memory_space<vmem>>, vector<16x896xbf16>,
    return
  }
  func.func @transform_0(%arg0: i32) -> (i32, i32) {
    %c0_i32 = arith.constant 0 : i32
    %c0_i32_0 = arith.constant 0 : i32
    return %arg0, %c0_i32 : i32, i32
  }
  func.func @transform_1(%arg0: i32) -> (i32, i32) {
    %c0_i32 = arith.constant 0 : i32
    %c0_i32_0 = arith.constant 0 : i32
    %c0_i32_1 = arith.constant 0 : i32
    return %c0_i32, %c0_i32_0 : i32, i32
  }
  func.func @transform_2(%arg0: i32) -> (i32, i32) {
    %c0_i32 = arith.constant 0 : i32
    %c0_i32_0 = arith.constant 0 : i32
    %c0_i32_1 = arith.constant 0 : i32
    return %c0_i32, %c0_i32_0 : i32, i32
  }
  func.func @transform_3(%arg0: i32) -> (i32, i32) {
    %c0_i32 = arith.constant 0 : i32
    %c0_i32_0 = arith.constant 0 : i32
    %c0_i32_1 = arith.constant 0 : i32
    return %c0_i32, %c0_i32_0 : i32, i32
  }
  func.func @transform_4(%arg0: i32) -> (i32, i32) {
    %c0_i32 = arith.constant 0 : i32
    %c0_i32_0 = arith.constant 0 : i32
    %c0_i32_1 = arith.constant 0 : i32
    return %c0_i32, %c0_i32_0 : i32, i32
  }
  func.func @transform_5(%arg0: i32) -> (i32, i32) {
    %c0_i32 = arith.constant 0 : i32
    %c0_i32_0 = arith.constant 0 : i32
    %c0_i32_1 = arith.constant 0 : i32
    return %c0_i32, %c0_i32_0 : i32, i32
  }
  func.func @transform_6(%arg0: i32) -> (i32, i32) {
    %c0_i32 = arith.constant 0 : i32
    %c0_i32_0 = arith.constant 0 : i32
    %c0_i32_1 = arith.constant 0 : i32
    return %c0_i32, %c0_i32_0 : i32, i32
  }
  func.func @transform_7(%arg0: i32) -> (i32, i32) {
    %c0_i32 = arith.constant 0 : i32
    %c0_i32_0 = arith.constant 0 : i32
    %c0_i32_1 = arith.constant 0 : i32
    return %c0_i32, %c0_i32_0 : i32, i32
  }
  func.func @transform_8(%arg0: i32) -> (i32, i32) {
    %c0_i32 = arith.constant 0 : i32
    %c0_i32_0 = arith.constant 0 : i32
    %c0_i32_1 = arith.constant 0 : i32
    return %c0_i32, %c0_i32_0 : i32, i32
  }
  func.func @transform_9(%arg0: i32) -> (i32, i32) {
    %c0_i32 = arith.constant 0 : i32
    %c0_i32_0 = arith.constant 0 : i32
    return %arg0, %c0_i32 : i32, i32
  }
  func.func @transform_10(%arg0: i32) -> (i32, i32) {
    %c0_i32 = arith.constant 0 : i32
    %c0_i32_0 = arith.constant 0 : i32
    return %arg0, %c0_i32 : i32, i32
  }
}

</mosaic_0001>

<llo_original>
// kernel: autoencoder_forward_padded.1
$region0: #{autoencoder_forward_padded.1}
  #allocation0 [shape = 'u32[]', space=smem, size = 0x4, offset = 0x4, fixed_abs, tag = 'smem constant byte address 0x4 - core index']
  #allocation1 [shape = 'u32[72,128]{1,0:T(1,128)}', space=vmem, size = 0x9000, scoped, tag = 'internal scratch']
  %s0 = inlined_call_operand.hbm [shape: f32[32,784], index: 0, kind: input, shape index: {}]
  %s1 = inlined_call_operand.hbm [shape: bf16[784,256], index: 1, kind: input, shape index: {}]
  %s2 = inlined_call_operand.hbm [shape: f32[1,256], index: 2, kind: input, shape index: {}]
  %s3 = inlined_call_operand.hbm [shape: bf16[256,128], index: 3, kind: input, shape index: {}]
  %s4 = inlined_call_operand.hbm [shape: f32[1,128], index: 4, kind: input, shape index: {}]
  %s5 = inlined_call_operand.hbm [shape: bf16[128,256], index: 5, kind: input, shape index: {}]
  %s6 = inlined_call_operand.vmem [shape: f32[1,256], index: 6, kind: input, shape index: {}]
  %s7 = inlined_call_operand.hbm [shape: bf16[256,896], index: 7, kind: input, shape index: {}]
  %s8 = inlined_call_operand.hbm [shape: f32[1,896], index: 8, kind: input, shape index: {}]
  %s9 = inlined_call_operand.hbm [shape: bf16[32,128], index: 9, kind: output, shape index: {0}]
  %s10 = inlined_call_operand.hbm [shape: bf16[32,896], index: 10, kind: output, shape index: {1}]
  %11 = xla_tuple %s9, %s10
  %s12 = sld [smem:[#allocation0]]
  $region109: #{autoencoder_forward_padded.1} parent=0
    _
  %s14 = ssub.s32 1, %s12
  %s15 = scalar_select 0, %s14, %s12
  $region1: #{autoencoder_forward_padded.1} parent=0
    #allocation2 [shape = 'u8[114688]{0}', space=vmem, size = 0x1c000, scoped, tag = 'input window, operand 0']
    #allocation3 [shape = 's32[2]{0}', space=sflag, size = 0x8, scoped, tag = 'scoped memory for autoencoder_forward_padded.1']
    #allocation4 [shape = 's32[2]{0}', space=sflag, size = 0x8, scoped, tag = 'scoped memory for autoencoder_forward_padded.1']
    #allocation5 [shape = 'u8[401408]{0}', space=vmem, size = 0x62000, scoped, tag = 'input window, operand 1, single buffered']
    #allocation6 [shape = 's32[1]{0}', space=sflag, size = 0x4, scoped, tag = 'scoped memory for autoencoder_forward_padded.1']
    #allocation7 [shape = 'u8[1024]{0}', space=vmem, size = 0x400, scoped, tag = 'input window, operand 2, single buffered']
    #allocation8 [shape = 'u8[65536]{0}', space=vmem, size = 0x10000, scoped, tag = 'input window, operand 3, single buffered']
    #allocation9 [shape = 's32[1]{0}', space=sflag, size = 0x4, scoped, tag = 'scoped memory for autoencoder_forward_padded.1']
    #allocation10 [shape = 'u8[512]{0}', space=vmem, size = 0x400, scoped, tag = 'input window, operand 4, single buffered']
    #allocation11 [shape = 'u8[65536]{0}', space=vmem, size = 0x10000, scoped, tag = 'input window, operand 5, single buffered']
    #allocation12 [shape = 's32[1]{0}', space=sflag, size = 0x4, scoped, tag = 'scoped memory for autoencoder_forward_padded.1']
    #allocation13 [shape = 'u8[458752]{0}', space=vmem, size = 0x70000, scoped, tag = 'input window, operand 7, single buffered']
    #allocation14 [shape = 'u8[3584]{0}', space=vmem, size = 0x1000, scoped, tag = 'input window, operand 8, single buffered']
    #allocation15 [shape = 's32[1]{0}', space=sflag, size = 0x4, scoped, tag = 'scoped memory for autoencoder_forward_padded.1']
    #allocation16 [shape = 'u8[8192]{0}', space=vmem, size = 0x2000, scoped, tag = 'output window, operand 0']
    #allocation17 [shape = 'u8[57344]{0}', space=vmem, size = 0xe000, scoped, tag = 'output window, operand 1']
    #allocation18 [shape = 's32[2]{0}', space=sflag, size = 0x8, scoped, tag = 'scoped memory for autoencoder_forward_padded.1']
    %16 = vsyncpa [#allocation3], 0
    %s17 = scalar_lea.sflag [#allocation3], 1
    %18 = vsyncpa %s17, 0
    %19 = vsyncpa [#allocation6], 0
    %20 = vsyncpa [#allocation9], 0
    %21 = vsyncpa [#allocation12], 0
    %22 = vsyncpa [#allocation15], 0
    %23 = vsyncpa [#allocation4], 0
    %s24 = scalar_lea.sflag [#allocation4], 1
    %25 = vsyncpa %s24, 0
    %26 = vsyncpa [#allocation18], 0
    %s27 = scalar_lea.sflag [#allocation18], 1
    %28 = vsyncpa %s27, 0
    loop: start=0, step=1, limit=4
    $region2: #{autoencoder_forward_padded.1} parent=1 // loop_pre_header
      _
    $region3: #{autoencoder_forward_padded.1} parent=1 // loop_header
      %s30 = sphi 0, %s34
      %p31 = scmp.ge.s32.totalorder %s30, 4
      %s40 = sphi 0, %s42
      %s43 = sphi 0, %s40
      %s44 = sphi 0, %s43
      %s60 = sphi 0, %s44
      %s64 = sphi 0, %s64
      %s66 = sphi 0, %s64
      %s67 = sphi 0, %s66
      %s81 = sphi 0, %s67
      %s85 = sphi 0, %s85
      %s87 = sphi 0, %s85
      %s88 = sphi 0, %s87
      %s102 = sphi 0, %s88
      %s106 = sphi 0, %s106
      %s108 = sphi 0, %s106
      %s109 = sphi 0, %s108
      %s123 = sphi 0, %s109
      %s127 = sphi 0, %s127
      %s129 = sphi 0, %s127
      %s130 = sphi 0, %s129
      %s144 = sphi 0, %s130
      %s148 = sphi 0, %s148
      %s150 = sphi 0, %s148
      %s151 = sphi 0, %s150
      %s165 = sphi 0, %s151
      %s169 = sphi 0, %s169
      %s171 = sphi 0, %s169
      %s172 = sphi 0, %s171
      %s186 = sphi 0, %s172
      %s190 = sphi 0, %s190
      %s192 = sphi 0, %s190
      %s193 = sphi 0, %s192
      %s207 = sphi 0, %s193
      %s211 = sphi 0, %s211
      %s213 = sphi 0, %s211
      %s214 = sphi 0, %s213
      %s228 = sphi 0, %s214
      %s234 = sphi 0, %s236
      %s237 = sphi 0, %s234
      %s238 = sphi 0, %s237
      %s254 = sphi 0, %s238
      %s260 = sphi 0, %s262
      %s263 = sphi 0, %s260
      %s264 = sphi 0, %s263
      %s280 = sphi 0, %s264
    $region4: #{autoencoder_forward_padded.1} parent=1 // loop_header_branch
      %33 = sbr.rel (%p31) target = $region8
    $region5: #{autoencoder_forward_padded.1} parent=1 // loop_body
      %s35 = ssub.s32 %s30, 1
      %s36 = ssub.s32 %s30, 2
      %s37 = sadd.s32 %s30, 1
      %s38 = ssub.s32 %s30, %s37
      %p39 = scmp.eq.s32.totalorder %s38, 0
      %s41 = sadd.s32 %s40, 1
      %s42 = scalar_select %p39, %s40, %s41
      %p45 = pneg %p39
      %p46 = scmp.eq.s32.totalorder %s30, 1
      %p47 = por %p45, %p46
      %p48 = scmp.ne.s32.totalorder %s40, %s43
      %p49 = scmp.eq.s32.totalorder %s30, 0
      %p50 = por %p48, %p49
      %p51 = scmp.ne.s32.totalorder %s40, %s43
      %p52 = scmp.eq.s32.totalorder %s35, 1
      %p53 = por %p51, %p52
      %p54 = scmp.ne.s32.totalorder %s43, %s44
      %p55 = scmp.eq.s32.totalorder %s35, 0
      %p56 = por %p54, %p55
      %p57 = scmp.ne.s32.totalorder %s43, %s44
      %p58 = scmp.eq.s32.totalorder %s36, 1
      %p59 = por %p57, %p58
      %p61 = scmp.ne.s32.totalorder %s44, %s60
      %p62 = scmp.eq.s32.totalorder %s36, 0
      %p63 = por %p61, %p62
      %s65 = sadd.s32 %s64, 1
      %p68 = scmp.eq.s32.totalorder %s30, 1
      %p69 = scmp.ne.s32.totalorder %s64, %s66
      %p70 = scmp.eq.s32.totalorder %s30, 0
      %p71 = por %p69, %p70
      %p72 = scmp.ne.s32.totalorder %s64, %s66
      %p73 = scmp.eq.s32.totalorder %s35, 1
      %p74 = por %p72, %p73
      %p75 = scmp.ne.s32.totalorder %s66, %s67
      %p76 = scmp.eq.s32.totalorder %s35, 0
      %p77 = por %p75, %p76
      %p78 = scmp.ne.s32.totalorder %s66, %s67
      %p79 = scmp.eq.s32.totalorder %s36, 1
      %p80 = por %p78, %p79
      %p82 = scmp.ne.s32.totalorder %s67, %s81
      %p83 = scmp.eq.s32.totalorder %s36, 0
      %p84 = por %p82, %p83
      %s86 = sadd.s32 %s85, 1
      %p89 = scmp.eq.s32.totalorder %s30, 1
      %p90 = scmp.ne.s32.totalorder %s85, %s87
      %p91 = scmp.eq.s32.totalorder %s30, 0
      %p92 = por %p90, %p91
      %p93 = scmp.ne.s32.totalorder %s85, %s87
      %p94 = scmp.eq.s32.totalorder %s35, 1
      %p95 = por %p93, %p94
      %p96 = scmp.ne.s32.totalorder %s87, %s88
      %p97 = scmp.eq.s32.totalorder %s35, 0
      %p98 = por %p96, %p97
      %p99 = scmp.ne.s32.totalorder %s87, %s88
      %p100 = scmp.eq.s32.totalorder %s36, 1
      %p101 = por %p99, %p100
      %p103 = scmp.ne.s32.totalorder %s88, %s102
      %p104 = scmp.eq.s32.totalorder %s36, 0
      %p105 = por %p103, %p104
      %s107 = sadd.s32 %s106, 1
      %p110 = scmp.eq.s32.totalorder %s30, 1
      %p111 = scmp.ne.s32.totalorder %s106, %s108
      %p112 = scmp.eq.s32.totalorder %s30, 0
      %p113 = por %p111, %p112
      %p114 = scmp.ne.s32.totalorder %s106, %s108
      %p115 = scmp.eq.s32.totalorder %s35, 1
      %p116 = por %p114, %p115
      %p117 = scmp.ne.s32.totalorder %s108, %s109
      %p118 = scmp.eq.s32.totalorder %s35, 0
      %p119 = por %p117, %p118
      %p120 = scmp.ne.s32.totalorder %s108, %s109
      %p121 = scmp.eq.s32.totalorder %s36, 1
      %p122 = por %p120, %p121
      %p124 = scmp.ne.s32.totalorder %s109, %s123
      %p125 = scmp.eq.s32.totalorder %s36, 0
      %p126 = por %p124, %p125
      %s128 = sadd.s32 %s127, 1
      %p131 = scmp.eq.s32.totalorder %s30, 1
      %p132 = scmp.ne.s32.totalorder %s127, %s129
      %p133 = scmp.eq.s32.totalorder %s30, 0
      %p134 = por %p132, %p133
      %p135 = scmp.ne.s32.totalorder %s127, %s129
      %p136 = scmp.eq.s32.totalorder %s35, 1
      %p137 = por %p135, %p136
      %p138 = scmp.ne.s32.totalorder %s129, %s130
      %p139 = scmp.eq.s32.totalorder %s35, 0
      %p140 = por %p138, %p139
      %p141 = scmp.ne.s32.totalorder %s129, %s130
      %p142 = scmp.eq.s32.totalorder %s36, 1
      %p143 = por %p141, %p142
      %p145 = scmp.ne.s32.totalorder %s130, %s144
      %p146 = scmp.eq.s32.totalorder %s36, 0
      %p147 = por %p145, %p146
      %s149 = sadd.s32 %s148, 1
      %p152 = scmp.eq.s32.totalorder %s30, 1
      %p153 = scmp.ne.s32.totalorder %s148, %s150
      %p154 = scmp.eq.s32.totalorder %s30, 0
      %p155 = por %p153, %p154
      %p156 = scmp.ne.s32.totalorder %s148, %s150
      %p157 = scmp.eq.s32.totalorder %s35, 1
      %p158 = por %p156, %p157
      %p159 = scmp.ne.s32.totalorder %s150, %s151
      %p160 = scmp.eq.s32.totalorder %s35, 0
      %p161 = por %p159, %p160
      %p162 = scmp.ne.s32.totalorder %s150, %s151
      %p163 = scmp.eq.s32.totalorder %s36, 1
      %p164 = por %p162, %p163
      %p166 = scmp.ne.s32.totalorder %s151, %s165
      %p167 = scmp.eq.s32.totalorder %s36, 0
      %p168 = por %p166, %p167
      %s170 = sadd.s32 %s169, 1
      %p173 = scmp.eq.s32.totalorder %s30, 1
      %p174 = scmp.ne.s32.totalorder %s169, %s171
      %p175 = scmp.eq.s32.totalorder %s30, 0
      %p176 = por %p174, %p175
      %p177 = scmp.ne.s32.totalorder %s169, %s171
      %p178 = scmp.eq.s32.totalorder %s35, 1
      %p179 = por %p177, %p178
      %p180 = scmp.ne.s32.totalorder %s171, %s172
      %p181 = scmp.eq.s32.totalorder %s35, 0
      %p182 = por %p180, %p181
      %p183 = scmp.ne.s32.totalorder %s171, %s172
      %p184 = scmp.eq.s32.totalorder %s36, 1
      %p185 = por %p183, %p184
      %p187 = scmp.ne.s32.totalorder %s172, %s186
      %p188 = scmp.eq.s32.totalorder %s36, 0
      %p189 = por %p187, %p188
      %s191 = sadd.s32 %s190, 1
      %p194 = scmp.eq.s32.totalorder %s30, 1
      %p195 = scmp.ne.s32.totalorder %s190, %s192
      %p196 = scmp.eq.s32.totalorder %s30, 0
      %p197 = por %p195, %p196
      %p198 = scmp.ne.s32.totalorder %s190, %s192
      %p199 = scmp.eq.s32.totalorder %s35, 1
      %p200 = por %p198, %p199
      %p201 = scmp.ne.s32.totalorder %s192, %s193
      %p202 = scmp.eq.s32.totalorder %s35, 0
      %p203 = por %p201, %p202
      %p204 = scmp.ne.s32.totalorder %s192, %s193
      %p205 = scmp.eq.s32.totalorder %s36, 1
      %p206 = por %p204, %p205
      %p208 = scmp.ne.s32.totalorder %s193, %s207
      %p209 = scmp.eq.s32.totalorder %s36, 0
      %p210 = por %p208, %p209
      %s212 = sadd.s32 %s211, 1
      %p215 = scmp.eq.s32.totalorder %s30, 1
      %p216 = scmp.ne.s32.totalorder %s211, %s213
      %p217 = scmp.eq.s32.totalorder %s30, 0
      %p218 = por %p216, %p217
      %p219 = scmp.ne.s32.totalorder %s211, %s213
      %p220 = scmp.eq.s32.totalorder %s35, 1
      %p221 = por %p219, %p220
      %p222 = scmp.ne.s32.totalorder %s213, %s214
      %p223 = scmp.eq.s32.totalorder %s35, 0
      %p224 = por %p222, %p223
      %p225 = scmp.ne.s32.totalorder %s213, %s214
      %p226 = scmp.eq.s32.totalorder %s36, 1
      %p227 = por %p225, %p226
      %p229 = scmp.ne.s32.totalorder %s214, %s228
      %p230 = scmp.eq.s32.totalorder %s36, 0
      %p231 = por %p229, %p230
      %s232 = ssub.s32 %s30, %s37
      %p233 = scmp.eq.s32.totalorder %s232, 0
      %s235 = sadd.s32 %s234, 1
      %s236 = scalar_select %p233, %s234, %s235
      %p239 = pneg %p233
      %p240 = scmp.eq.s32.totalorder %s30, 1
      %p241 = por %p239, %p240
      %p242 = scmp.ne.s32.totalorder %s234, %s237
      %p243 = scmp.eq.s32.totalorder %s30, 0
      %p244 = por %p242, %p243
      %p245 = scmp.ne.s32.totalorder %s234, %s237
      %p246 = scmp.eq.s32.totalorder %s35, 1
      %p247 = por %p245, %p246
      %p248 = scmp.ne.s32.totalorder %s237, %s238
      %p249 = scmp.eq.s32.totalorder %s35, 0
      %p250 = por %p248, %p249
      %p251 = scmp.ne.s32.totalorder %s237, %s238
      %p252 = scmp.eq.s32.totalorder %s36, 1
      %p253 = por %p251, %p252
      %p255 = scmp.ne.s32.totalorder %s238, %s254
      %p256 = scmp.eq.s32.totalorder %s36, 0
      %p257 = por %p255, %p256
      %s258 = ssub.s32 %s30, %s37
      %p259 = scmp.eq.s32.totalorder %s258, 0
      %s261 = sadd.s32 %s260, 1
      %s262 = scalar_select %p259, %s260, %s261
      %p265 = pneg %p259
      %p266 = scmp.eq.s32.totalorder %s30, 1
      %p267 = por %p265, %p266
      %p268 = scmp.ne.s32.totalorder %s260, %s263
      %p269 = scmp.eq.s32.totalorder %s30, 0
      %p270 = por %p268, %p269
      %p271 = scmp.ne.s32.totalorder %s260, %s263
      %p272 = scmp.eq.s32.totalorder %s35, 1
      %p273 = por %p271, %p272
      %p274 = scmp.ne.s32.totalorder %s263, %s264
      %p275 = scmp.eq.s32.totalorder %s35, 0
      %p276 = por %p274, %p275
      %p277 = scmp.ne.s32.totalorder %s263, %s264
      %p278 = scmp.eq.s32.totalorder %s36, 1
      %p279 = por %p277, %p278
      %p281 = scmp.ne.s32.totalorder %s264, %s280
      %p282 = scmp.eq.s32.totalorder %s36, 0
      %p283 = por %p281, %p282
      %p284 = scmp.le.s32.totalorder 1, %s30
      %p285 = scmp.lt.s32.totalorder %s30, 3
      %p286 = pnand %p284, %p285
      %p287 = pneg %p286
      // Predicated region
      $region9: #{autoencoder_forward_padded.1} parent=5 // pred_check
        _
      $region10: #{autoencoder_forward_padded.1} parent=5 // pred_check_branch
        %289 = sbr.rel (%p286) target = $region12
      $region11: #{autoencoder_forward_padded.1} parent=5 // pred_region
        %s290 = ssub.s32 %s30, 1
        // Predicated region
        $region13: #{autoencoder_forward_padded.1} parent=11 // pred_check
          %p291 = pneg %p77
        $region14: #{autoencoder_forward_padded.1} parent=11 // pred_check_branch
          %293 = sbr.rel (%p291) target = $region16
        $region15: #{autoencoder_forward_padded.1} parent=11 // pred_region
          %295 = vsyncadd [#allocation6], 0
          %s296 = sshll.u32 %s1, 4
          %s297 = int_to_ptr.hbm [resolvable:$true] %s296
          %s298 = sshll.u32 [#allocation5], 4
          %s299 = int_to_ptr.vmem [resolvable:$true] %s298
          %304 = dma.hbm_to_vmem [thread:$0]  %s297, 12544, %s299, [#allocation6], 128, 128, 8
        $region16: #{autoencoder_forward_padded.1} parent=11 // pred_fallthru
          _
        // Predicated region
        $region17: #{autoencoder_forward_padded.1} parent=11 // pred_check
          %p305 = pneg %p98
        $region18: #{autoencoder_forward_padded.1} parent=11 // pred_check_branch
          %307 = sbr.rel (%p305) target = $region20
        $region19: #{autoencoder_forward_padded.1} parent=11 // pred_region
          %309 = vsyncadd [#allocation6], 0
          %s311 = sshll.u32 %s2, 4
          %s312 = int_to_ptr.hbm [resolvable:$true] %s311
          %s313 = sshll.u32 [#allocation7], 4
          %s314 = int_to_ptr.vmem [resolvable:$true] %s313
          %316 = dma.hbm_to_vmem [thread:$0]  %s312, 32, %s314, [#allocation6]
        $region20: #{autoencoder_forward_padded.1} parent=11 // pred_fallthru
          _
        // Predicated region
        $region21: #{autoencoder_forward_padded.1} parent=11 // pred_check
          %p317 = pneg %p119
        $region22: #{autoencoder_forward_padded.1} parent=11 // pred_check_branch
          %319 = sbr.rel (%p317) target = $region24
        $region23: #{autoencoder_forward_padded.1} parent=11 // pred_region
          %321 = vsyncadd [#allocation9], 0
          %s322 = sshll.u32 %s3, 4
          %s323 = int_to_ptr.hbm [resolvable:$true] %s322
          %s324 = sshll.u32 [#allocation8], 4
          %s325 = int_to_ptr.vmem [resolvable:$true] %s324
          %330 = dma.hbm_to_vmem [thread:$0]  %s323, 2048, %s325, [#allocation9], 64, 64, 4
        $region24: #{autoencoder_forward_padded.1} parent=11 // pred_fallthru
          _
        // Predicated region
        $region25: #{autoencoder_forward_padded.1} parent=11 // pred_check
          %p331 = pneg %p140
        $region26: #{autoencoder_forward_padded.1} parent=11 // pred_check_branch
          %333 = sbr.rel (%p331) target = $region28
        $region27: #{autoencoder_forward_padded.1} parent=11 // pred_region
          %335 = vsyncadd [#allocation9], 0
          %s337 = sshll.u32 %s4, 4
          %s338 = int_to_ptr.hbm [resolvable:$true] %s337
          %s339 = sshll.u32 [#allocation10], 4
          %s340 = int_to_ptr.vmem [resolvable:$true] %s339
          %342 = dma.hbm_to_vmem [thread:$0]  %s338, 16, %s340, [#allocation9]
        $region28: #{autoencoder_forward_padded.1} parent=11 // pred_fallthru
          _
        // Predicated region
        $region29: #{autoencoder_forward_padded.1} parent=11 // pred_check
          %p343 = pneg %p161
        $region30: #{autoencoder_forward_padded.1} parent=11 // pred_check_branch
          %345 = sbr.rel (%p343) target = $region32
        $region31: #{autoencoder_forward_padded.1} parent=11 // pred_region
          %347 = vsyncadd [#allocation12], 0
          %s348 = sshll.u32 %s5, 4
          %s349 = int_to_ptr.hbm [resolvable:$true] %s348
          %s350 = sshll.u32 [#allocation11], 4
          %s351 = int_to_ptr.vmem [resolvable:$true] %s350
          %356 = dma.hbm_to_vmem [thread:$0]  %s349, 2048, %s351, [#allocation12], 128, 128, 8
        $region32: #{autoencoder_forward_padded.1} parent=11 // pred_fallthru
          _
        // Predicated region
        $region33: #{autoencoder_forward_padded.1} parent=11 // pred_check
          %p357 = pneg %p182
        $region34: #{autoencoder_forward_padded.1} parent=11 // pred_check_branch
          %359 = sbr.rel (%p357) target = $region36
        $region35: #{autoencoder_forward_padded.1} parent=11 // pred_region
          _
        $region36: #{autoencoder_forward_padded.1} parent=11 // pred_fallthru
          _
        // Predicated region
        $region37: #{autoencoder_forward_padded.1} parent=11 // pred_check
          %p360 = pneg %p203
        $region38: #{autoencoder_forward_padded.1} parent=11 // pred_check_branch
          %362 = sbr.rel (%p360) target = $region40
        $region39: #{autoencoder_forward_padded.1} parent=11 // pred_region
          %364 = vsyncadd [#allocation12], 0
          %s365 = sshll.u32 %s7, 4
          %s366 = int_to_ptr.hbm [resolvable:$true] %s365
          %s367 = sshll.u32 [#allocation13], 4
          %s368 = int_to_ptr.vmem [resolvable:$true] %s367
          %373 = dma.hbm_to_vmem [thread:$0]  %s366, 14336, %s368, [#allocation12], 448, 448, 28
        $region40: #{autoencoder_forward_padded.1} parent=11 // pred_fallthru
          _
        // Predicated region
        $region41: #{autoencoder_forward_padded.1} parent=11 // pred_check
          %p374 = pneg %p224
        $region42: #{autoencoder_forward_padded.1} parent=11 // pred_check_branch
          %376 = sbr.rel (%p374) target = $region44
        $region43: #{autoencoder_forward_padded.1} parent=11 // pred_region
          %378 = vsyncadd [#allocation15], 0
          %s380 = sshll.u32 %s8, 4
          %s381 = int_to_ptr.hbm [resolvable:$true] %s380
          %s382 = sshll.u32 [#allocation14], 4
          %s383 = int_to_ptr.vmem [resolvable:$true] %s382
          %385 = dma.hbm_to_vmem [thread:$0]  %s381, 112, %s383, [#allocation15]
        $region44: #{autoencoder_forward_padded.1} parent=11 // pred_fallthru
          _
      $region12: #{autoencoder_forward_padded.1} parent=5 // pred_fallthru
        _
      %p386 = scmp.lt.s32.totalorder %s30, 2
      // Predicated region
      $region45: #{autoencoder_forward_padded.1} parent=5 // pred_check
        %p387 = pneg %p386
      $region46: #{autoencoder_forward_padded.1} parent=5 // pred_check_branch
        %389 = sbr.rel (%p387) target = $region48
      $region47: #{autoencoder_forward_padded.1} parent=5 // pred_region
        // Predicated region
        $region49: #{autoencoder_forward_padded.1} parent=47 // pred_check
          %p390 = pneg %p50
        $region50: #{autoencoder_forward_padded.1} parent=47 // pred_check_branch
          %392 = sbr.rel (%p390) target = $region52
        $region51: #{autoencoder_forward_padded.1} parent=47 // pred_region
          %s393 = sand.u32 %s40, 1
          %s394 = scalar_lea.sflag [#allocation3], %s393
          %s395 = sand.u32 %s40, 1
          %s396 = smul.addr %s395, 112
          %s397 = scalar_lea.vmem [#allocation2], %s396
          %s398 = smul.u32 2, %s30
          %400 = vsyncadd %s394, 0
          %s401 = smul.addr %s398, 7
          %s402 = smul.addr %s401, 8
          %s403 = scalar_lea.hbm %s0, %s402
          %s404 = sshll.u32 %s403, 4
          %s405 = int_to_ptr.hbm [resolvable:$true] %s404
          %s406 = sshll.u32 %s397, 4
          %s407 = int_to_ptr.vmem [resolvable:$true] %s406
          %412 = dma.hbm_to_vmem [thread:$0]  %s405, 1792, %s407, %s394, 896, 896, 56
        $region52: #{autoencoder_forward_padded.1} parent=47 // pred_fallthru
          _
      $region48: #{autoencoder_forward_padded.1} parent=5 // pred_fallthru
        _
      %p413 = scmp.le.s32.totalorder 1, %s30
      %p414 = scmp.lt.s32.totalorder %s30, 3
      %p415 = pnand %p413, %p414
      %p416 = pneg %p415
      // Predicated region
      $region53: #{autoencoder_forward_padded.1} parent=5 // pred_check
        _
      $region54: #{autoencoder_forward_padded.1} parent=5 // pred_check_branch
        %418 = sbr.rel (%p415) target = $region56
      $region55: #{autoencoder_forward_padded.1} parent=5 // pred_region
        %s419 = ssub.s32 %s30, 1
        %s420 = sand.u32 %s43, 1
        %s421 = scalar_lea.sflag [#allocation3], %s420
        %s422 = sand.u32 %s43, 1
        %s423 = smul.addr %s422, 112
        %s424 = scalar_lea.vmem [#allocation2], %s423
        // Predicated region
        $region57: #{autoencoder_forward_padded.1} parent=55 // pred_check
          %p425 = pneg %p56
        $region58: #{autoencoder_forward_padded.1} parent=55 // pred_check_branch
          %427 = sbr.rel (%p425) target = $region60
        $region59: #{autoencoder_forward_padded.1} parent=55 // pred_region
          %429 = dma.done %s421, 1792
        $region60: #{autoencoder_forward_padded.1} parent=55 // pred_fallthru
          _
        // Predicated region
        $region61: #{autoencoder_forward_padded.1} parent=55 // pred_check
          %p430 = pneg %p77
        $region62: #{autoencoder_forward_padded.1} parent=55 // pred_check_branch
          %432 = sbr.rel (%p430) target = $region64
        $region63: #{autoencoder_forward_padded.1} parent=55 // pred_region
          %434 = dma.done [#allocation6], 12544
        $region64: #{autoencoder_forward_padded.1} parent=55 // pred_fallthru
          _
        // Predicated region
        $region65: #{autoencoder_forward_padded.1} parent=55 // pred_check
          %p435 = pneg %p98
        $region66: #{autoencoder_forward_padded.1} parent=55 // pred_check_branch
          %437 = sbr.rel (%p435) target = $region68
        $region67: #{autoencoder_forward_padded.1} parent=55 // pred_region
          %439 = dma.done [#allocation6], 32
        $region68: #{autoencoder_forward_padded.1} parent=55 // pred_fallthru
          _
        // Predicated region
        $region69: #{autoencoder_forward_padded.1} parent=55 // pred_check
          %p440 = pneg %p119
        $region70: #{autoencoder_forward_padded.1} parent=55 // pred_check_branch
          %442 = sbr.rel (%p440) target = $region72
        $region71: #{autoencoder_forward_padded.1} parent=55 // pred_region
          %444 = dma.done [#allocation9], 2048
        $region72: #{autoencoder_forward_padded.1} parent=55 // pred_fallthru
          _
        // Predicated region
        $region73: #{autoencoder_forward_padded.1} parent=55 // pred_check
          %p445 = pneg %p140
        $region74: #{autoencoder_forward_padded.1} parent=55 // pred_check_branch
          %447 = sbr.rel (%p445) target = $region76
        $region75: #{autoencoder_forward_padded.1} parent=55 // pred_region
          %449 = dma.done [#allocation9], 16
        $region76: #{autoencoder_forward_padded.1} parent=55 // pred_fallthru
          _
        // Predicated region
        $region77: #{autoencoder_forward_padded.1} parent=55 // pred_check
          %p450 = pneg %p161
        $region78: #{autoencoder_forward_padded.1} parent=55 // pred_check_branch
          %452 = sbr.rel (%p450) target = $region80
        $region79: #{autoencoder_forward_padded.1} parent=55 // pred_region
          %454 = dma.done [#allocation12], 2048
        $region80: #{autoencoder_forward_padded.1} parent=55 // pred_fallthru
          _
        // Predicated region
        $region81: #{autoencoder_forward_padded.1} parent=55 // pred_check
          %p455 = pneg %p203
        $region82: #{autoencoder_forward_padded.1} parent=55 // pred_check_branch
          %457 = sbr.rel (%p455) target = $region84
        $region83: #{autoencoder_forward_padded.1} parent=55 // pred_region
          %459 = dma.done [#allocation12], 14336
        $region84: #{autoencoder_forward_padded.1} parent=55 // pred_fallthru
          _
        // Predicated region
        $region85: #{autoencoder_forward_padded.1} parent=55 // pred_check
          %p460 = pneg %p224
        $region86: #{autoencoder_forward_padded.1} parent=55 // pred_check_branch
          %462 = sbr.rel (%p460) target = $region88
        $region87: #{autoencoder_forward_padded.1} parent=55 // pred_region
          %464 = dma.done [#allocation15], 112
        $region88: #{autoencoder_forward_padded.1} parent=55 // pred_fallthru
          _
        %s465 = sand.u32 %s43, 1
        %s466 = scalar_lea.sflag [#allocation3], %s465
        %s467 = sand.u32 %s43, 1
        %s468 = smul.addr %s467, 112
        %s469 = scalar_lea.vmem [#allocation2], %s468
        %p470 = pneg %p56
        %p471 = pneg %p53
        %p472 = pneg %p77
        %p473 = pneg %p74
        %p474 = pneg %p98
        %p475 = pneg %p95
        %p476 = pneg %p119
        %p477 = pneg %p116
        %p478 = pneg %p140
        %p479 = pneg %p137
        %p480 = pneg %p161
        %p481 = pneg %p158
        %p482 = pneg %p182
        %p483 = pneg %p179
        %p484 = pneg %p203
        %p485 = pneg %p200
        %p486 = pneg %p224
        %p487 = pneg %p221
        %p488 = pneg %p250
        %p489 = pneg %p247
        %s490 = sand.u32 %s237, 1
        %s491 = scalar_lea.sflag [#allocation4], %s490
        %s492 = sand.u32 %s237, 1
        %s493 = smul.addr %s492, 8
        %s494 = scalar_lea.vmem [#allocation16], %s493
        %p495 = pneg %p276
        %p496 = pneg %p273
        %s497 = sand.u32 %s263, 1
        %s498 = scalar_lea.sflag [#allocation18], %s497
        %s499 = sand.u32 %s263, 1
        %s500 = smul.addr %s499, 56
        %s501 = scalar_lea.vmem [#allocation17], %s500
        %s502 = smul.u32 2, %s35
        %s503 = smul.u32 2, %s35
        %s504 = smul.u32 2, %s35
        %v506 = vld [vmem:[%s424] sm:$0xff]
        %v507 = vld [vmem:[%s424 + $0x8] sm:$0xff]
        %v508 = vld [vmem:[%s424 + $0x10] sm:$0xff]
        %v509 = vld [vmem:[%s424 + $0x18] sm:$0xff]
        %v510 = vld [vmem:[%s424 + $0x20] sm:$0xff]
        %v511 = vld [vmem:[%s424 + $0x28] sm:$0xff]
        %v512 = vld [vmem:[%s424 + $0x30] sm:$0xff]
        %v513 = vld [vmem:[%s424 + $0x38] sm:$0xff]
        %v514 = vld [vmem:[%s424 + $0x40] sm:$0xff]
        %v515 = vld [vmem:[%s424 + $0x48] sm:$0xff]
        %v516 = vld [vmem:[%s424 + $0x50] sm:$0xff]
        %v517 = vld [vmem:[%s424 + $0x58] sm:$0xff]
        %v518 = vld [vmem:[%s424 + $0x60] sm:$0xff]
        %v519 = vld [vmem:[%s424 + $0x68] sm:$0xff]
        %v520 = vpack.c.bf16 %v513, %v506
        %v521 = vpack.c.bf16 %v514, %v507
        %v522 = vpack.c.bf16 %v515, %v508
        %v523 = vpack.c.bf16 %v516, %v509
        %v524 = vpack.c.bf16 %v517, %v510
        %v525 = vpack.c.bf16 %v518, %v511
        %v526 = vpack.c.bf16 %v519, %v512
        %v527 = vld [vmem:[#allocation5] sm:$0xff]
        %v528 = vld [vmem:[#allocation5 + $0x8] sm:$0xff]
        %v529 = vld [vmem:[#allocation5 + $0x10] sm:$0xff]
        %v530 = vld [vmem:[#allocation5 + $0x18] sm:$0xff]
        %v531 = vld [vmem:[#allocation5 + $0x20] sm:$0xff]
        %v532 = vld [vmem:[#allocation5 + $0x28] sm:$0xff]
        %v533 = vld [vmem:[#allocation5 + $0x30] sm:$0xff]
        %v534 = vld [vmem:[#allocation5 + $0x38] sm:$0xff]
        %v535 = vld [vmem:[#allocation5 + $0x40] sm:$0xff]
        %v536 = vld [vmem:[#allocation5 + $0x48] sm:$0xff]
        %v537 = vld [vmem:[#allocation5 + $0x50] sm:$0xff]
        %v538 = vld [vmem:[#allocation5 + $0x58] sm:$0xff]
        %v539 = vld [vmem:[#allocation5 + $0x60] sm:$0xff]
        %v540 = vld [vmem:[#allocation5 + $0x68] sm:$0xff]
        %v541 = vld [vmem:[#allocation5 + $0x70] sm:$0xff]
        %v542 = vld [vmem:[#allocation5 + $0x78] sm:$0xff]
        %v543 = vld [vmem:[#allocation5 + $0x80] sm:$0xff]
        %v544 = vld [vmem:[#allocation5 + $0x88] sm:$0xff]
        %v545 = vld [vmem:[#allocation5 + $0x90] sm:$0xff]
        %v546 = vld [vmem:[#allocation5 + $0x98] sm:$0xff]
        %v547 = vld [vmem:[#allocation5 + $0xa0] sm:$0xff]
        %v548 = vld [vmem:[#allocation5 + $0xa8] sm:$0xff]
        %v549 = vld [vmem:[#allocation5 + $0xb0] sm:$0xff]
        %v550 = vld [vmem:[#allocation5 + $0xb8] sm:$0xff]
        %v551 = vld [vmem:[#allocation5 + $0xc0] sm:$0xff]
        %v552 = vld [vmem:[#allocation5 + $0xc8] sm:$0xff]
        %v553 = vld [vmem:[#allocation5 + $0xd0] sm:$0xff]
        %v554 = vld [vmem:[#allocation5 + $0xd8] sm:$0xff]
        %v555 = vld [vmem:[#allocation5 + $0xe0] sm:$0xff]
        %v556 = vld [vmem:[#allocation5 + $0xe8] sm:$0xff]
        %v557 = vld [vmem:[#allocation5 + $0xf0] sm:$0xff]
        %v558 = vld [vmem:[#allocation5 + $0xf8] sm:$0xff]
        %v559 = vld [vmem:[#allocation5 + $0x100] sm:$0xff]
        %v560 = vld [vmem:[#allocation5 + $0x108] sm:$0xff]
        %v561 = vld [vmem:[#allocation5 + $0x110] sm:$0xff]
        %v562 = vld [vmem:[#allocation5 + $0x118] sm:$0xff]
        %v563 = vld [vmem:[#allocation5 + $0x120] sm:$0xff]
        %v564 = vld [vmem:[#allocation5 + $0x128] sm:$0xff]
        %v565 = vld [vmem:[#allocation5 + $0x130] sm:$0xff]
        %v566 = vld [vmem:[#allocation5 + $0x138] sm:$0xff]
        %v567 = vld [vmem:[#allocation5 + $0x140] sm:$0xff]
        %v568 = vld [vmem:[#allocation5 + $0x148] sm:$0xff]
        %v569 = vld [vmem:[#allocation5 + $0x150] sm:$0xff]
        %v570 = vld [vmem:[#allocation5 + $0x158] sm:$0xff]
        %v571 = vld [vmem:[#allocation5 + $0x160] sm:$0xff]
        %v572 = vld [vmem:[#allocation5 + $0x168] sm:$0xff]
        %v573 = vld [vmem:[#allocation5 + $0x170] sm:$0xff]
        %v574 = vld [vmem:[#allocation5 + $0x178] sm:$0xff]
        %v575 = vld [vmem:[#allocation5 + $0x180] sm:$0xff]
        %v576 = vld [vmem:[#allocation5 + $0x188] sm:$0xff]
        %v577 = vld [vmem:[#allocation5 + $0x190] sm:$0xff]
        %v578 = vld [vmem:[#allocation5 + $0x198] sm:$0xff]
        %v579 = vld [vmem:[#allocation5 + $0x1a0] sm:$0xff]
        %v580 = vld [vmem:[#allocation5 + $0x1a8] sm:$0xff]
        %v581 = vld [vmem:[#allocation5 + $0x1b0] sm:$0xff]
        %v582 = vld [vmem:[#allocation5 + $0x1b8] sm:$0xff]
        %v583 = vld [vmem:[#allocation5 + $0x1c0] sm:$0xff]
        %v584 = vld [vmem:[#allocation5 + $0x1c8] sm:$0xff]
        %v585 = vld [vmem:[#allocation5 + $0x1d0] sm:$0xff]
        %v586 = vld [vmem:[#allocation5 + $0x1d8] sm:$0xff]
        %v587 = vld [vmem:[#allocation5 + $0x1e0] sm:$0xff]
        %v588 = vld [vmem:[#allocation5 + $0x1e8] sm:$0xff]
        %v589 = vld [vmem:[#allocation5 + $0x1f0] sm:$0xff]
        %v590 = vld [vmem:[#allocation5 + $0x1f8] sm:$0xff]
        %v591 = vld [vmem:[#allocation5 + $0x200] sm:$0xff]
        %v592 = vld [vmem:[#allocation5 + $0x208] sm:$0xff]
        %v593 = vld [vmem:[#allocation5 + $0x210] sm:$0xff]
        %v594 = vld [vmem:[#allocation5 + $0x218] sm:$0xff]
        %v595 = vld [vmem:[#allocation5 + $0x220] sm:$0xff]
        %v596 = vld [vmem:[#allocation5 + $0x228] sm:$0xff]
        %v597 = vld [vmem:[#allocation5 + $0x230] sm:$0xff]
        %v598 = vld [vmem:[#allocation5 + $0x238] sm:$0xff]
        %v599 = vld [vmem:[#allocation5 + $0x240] sm:$0xff]
        %v600 = vld [vmem:[#allocation5 + $0x248] sm:$0xff]
        %v601 = vld [vmem:[#allocation5 + $0x250] sm:$0xff]
        %v602 = vld [vmem:[#allocation5 + $0x258] sm:$0xff]
        %v603 = vld [vmem:[#allocation5 + $0x260] sm:$0xff]
        %v604 = vld [vmem:[#allocation5 + $0x268] sm:$0xff]
        %v605 = vld [vmem:[#allocation5 + $0x270] sm:$0xff]
        %v606 = vld [vmem:[#allocation5 + $0x278] sm:$0xff]
        %v607 = vld [vmem:[#allocation5 + $0x280] sm:$0xff]
        %v608 = vld [vmem:[#allocation5 + $0x288] sm:$0xff]
        %v609 = vld [vmem:[#allocation5 + $0x290] sm:$0xff]
        %v610 = vld [vmem:[#allocation5 + $0x298] sm:$0xff]
        %v611 = vld [vmem:[#allocation5 + $0x2a0] sm:$0xff]
        %v612 = vld [vmem:[#allocation5 + $0x2a8] sm:$0xff]
        %v613 = vld [vmem:[#allocation5 + $0x2b0] sm:$0xff]
        %v614 = vld [vmem:[#allocation5 + $0x2b8] sm:$0xff]
        %v615 = vld [vmem:[#allocation5 + $0x2c0] sm:$0xff]
        %v616 = vld [vmem:[#allocation5 + $0x2c8] sm:$0xff]
        %v617 = vld [vmem:[#allocation5 + $0x2d0] sm:$0xff]
        %v618 = vld [vmem:[#allocation5 + $0x2d8] sm:$0xff]
        %v619 = vld [vmem:[#allocation5 + $0x2e0] sm:$0xff]
        %v620 = vld [vmem:[#allocation5 + $0x2e8] sm:$0xff]
        %v621 = vld [vmem:[#allocation5 + $0x2f0] sm:$0xff]
        %v622 = vld [vmem:[#allocation5 + $0x2f8] sm:$0xff]
        %v623 = vld [vmem:[#allocation5 + $0x300] sm:$0xff]
        %v624 = vld [vmem:[#allocation5 + $0x308] sm:$0xff]
        %v625 = vld [vmem:[#allocation7] sm:$0x3]
        %v627 = vperm.slane %v625, 0
        %v628 = vperm.slane %v625, 1
        %v729 = vunpack.c.l.b16 %v527
        %v730 = vunpack.c.h.b16 %v527
        %v731 = vunpack.c.l.b16 %v528
        %v732 = vunpack.c.h.b16 %v528
        %v733 = vunpack.c.l.b16 %v529
        %v734 = vunpack.c.h.b16 %v529
        %v735 = vunpack.c.l.b16 %v530
        %v736 = vunpack.c.h.b16 %v530
        %v737 = vunpack.c.l.b16 %v531
        %v738 = vunpack.c.h.b16 %v531
        %v739 = vunpack.c.l.b16 %v532
        %v740 = vunpack.c.h.b16 %v532
        %v741 = vunpack.c.l.b16 %v533
        %v742 = vunpack.c.h.b16 %v533
        %v743 = vunpack.c.l.b16 %v534
        %v744 = vunpack.c.h.b16 %v534
        %v745 = vunpack.c.l.b16 %v535
        %v746 = vunpack.c.h.b16 %v535
        %v747 = vunpack.c.l.b16 %v536
        %v748 = vunpack.c.h.b16 %v536
        %v749 = vunpack.c.l.b16 %v537
        %v750 = vunpack.c.h.b16 %v537
        %v751 = vunpack.c.l.b16 %v538
        %v752 = vunpack.c.h.b16 %v538
        %v753 = vunpack.c.l.b16 %v539
        %v754 = vunpack.c.h.b16 %v539
        %v755 = vunpack.c.l.b16 %v540
        %v756 = vunpack.c.h.b16 %v540
        %v757 = vunpack.c.l.b16 %v541
        %v758 = vunpack.c.h.b16 %v541
        %v759 = vunpack.c.l.b16 %v542
        %v760 = vunpack.c.h.b16 %v542
        %v761 = vunpack.c.l.b16 %v543
        %v762 = vunpack.c.h.b16 %v543
        %v763 = vunpack.c.l.b16 %v544
        %v764 = vunpack.c.h.b16 %v544
        %v765 = vunpack.c.l.b16 %v545
        %v766 = vunpack.c.h.b16 %v545
        %v767 = vunpack.c.l.b16 %v546
        %v768 = vunpack.c.h.b16 %v546
        %v769 = vunpack.c.l.b16 %v547
        %v770 = vunpack.c.h.b16 %v547
        %v771 = vunpack.c.l.b16 %v548
        %v772 = vunpack.c.h.b16 %v548
        %v773 = vunpack.c.l.b16 %v549
        %v774 = vunpack.c.h.b16 %v549
        %v775 = vunpack.c.l.b16 %v550
        %v776 = vunpack.c.h.b16 %v550
        %v777 = vunpack.c.l.b16 %v551
        %v778 = vunpack.c.h.b16 %v551
        %v779 = vunpack.c.l.b16 %v552
        %v780 = vunpack.c.h.b16 %v552
        %v781 = vunpack.c.l.b16 %v553
        %v782 = vunpack.c.h.b16 %v553
        %v783 = vunpack.c.l.b16 %v554
        %v784 = vunpack.c.h.b16 %v554
        %v785 = vunpack.c.l.b16 %v555
        %v786 = vunpack.c.h.b16 %v555
        %v787 = vunpack.c.l.b16 %v556
        %v788 = vunpack.c.h.b16 %v556
        %v789 = vunpack.c.l.b16 %v557
        %v790 = vunpack.c.h.b16 %v557
        %v791 = vunpack.c.l.b16 %v558
        %v792 = vunpack.c.h.b16 %v558
        %v793 = vunpack.c.l.b16 %v559
        %v794 = vunpack.c.h.b16 %v559
        %v795 = vunpack.c.l.b16 %v560
        %v796 = vunpack.c.h.b16 %v560
        %v797 = vunpack.c.l.b16 %v561
        %v798 = vunpack.c.h.b16 %v561
        %v799 = vunpack.c.l.b16 %v562
        %v800 = vunpack.c.h.b16 %v562
        %v801 = vunpack.c.l.b16 %v563
        %v802 = vunpack.c.h.b16 %v563
        %v803 = vunpack.c.l.b16 %v564
        %v804 = vunpack.c.h.b16 %v564
        %v805 = vunpack.c.l.b16 %v565
        %v806 = vunpack.c.h.b16 %v565
        %v807 = vunpack.c.l.b16 %v566
        %v808 = vunpack.c.h.b16 %v566
        %v809 = vunpack.c.l.b16 %v567
        %v810 = vunpack.c.h.b16 %v567
        %v811 = vunpack.c.l.b16 %v568
        %v812 = vunpack.c.h.b16 %v568
        %v813 = vunpack.c.l.b16 %v569
        %v814 = vunpack.c.h.b16 %v569
        %v815 = vunpack.c.l.b16 %v570
        %v816 = vunpack.c.h.b16 %v570
        %v817 = vunpack.c.l.b16 %v571
        %v818 = vunpack.c.h.b16 %v571
        %v819 = vunpack.c.l.b16 %v572
        %v820 = vunpack.c.h.b16 %v572
        %v821 = vunpack.c.l.b16 %v573
        %v822 = vunpack.c.h.b16 %v573
        %v823 = vunpack.c.l.b16 %v574
        %v824 = vunpack.c.h.b16 %v574
        %v825 = vunpack.c.l.b16 %v575
        %v826 = vunpack.c.h.b16 %v575
        %v827 = vunpack.c.l.b16 %v576
        %v828 = vunpack.c.h.b16 %v576
        %v829 = vunpack.c.l.b16 %v577
        %v830 = vunpack.c.h.b16 %v577
        %v831 = vunpack.c.l.b16 %v578
        %v832 = vunpack.c.h.b16 %v578
        %v833 = vunpack.c.l.b16 %v579
        %v834 = vunpack.c.h.b16 %v579
        %v835 = vunpack.c.l.b16 %v580
        %v836 = vunpack.c.h.b16 %v580
        %v837 = vunpack.c.l.b16 %v581
        %v838 = vunpack.c.h.b16 %v581
        %v839 = vunpack.c.l.b16 %v582
        %v840 = vunpack.c.h.b16 %v582
        %v841 = vunpack.c.l.b16 %v583
        %v842 = vunpack.c.h.b16 %v583
        %v843 = vunpack.c.l.b16 %v584
        %v844 = vunpack.c.h.b16 %v584
        %v845 = vunpack.c.l.b16 %v585
        %v846 = vunpack.c.h.b16 %v585
        %v847 = vunpack.c.l.b16 %v586
        %v848 = vunpack.c.h.b16 %v586
        %v849 = vunpack.c.l.b16 %v587
        %v850 = vunpack.c.h.b16 %v587
        %v851 = vunpack.c.l.b16 %v588
        %v852 = vunpack.c.h.b16 %v588
        %v853 = vunpack.c.l.b16 %v589
        %v854 = vunpack.c.h.b16 %v589
        %v855 = vunpack.c.l.b16 %v590
        %v856 = vunpack.c.h.b16 %v590
        %v857 = vunpack.c.l.b16 %v591
        %v858 = vunpack.c.h.b16 %v591
        %v859 = vunpack.c.l.b16 %v592
        %v860 = vunpack.c.h.b16 %v592
        %v861 = vunpack.c.l.b16 %v593
        %v862 = vunpack.c.h.b16 %v593
        %v863 = vunpack.c.l.b16 %v594
        %v864 = vunpack.c.h.b16 %v594
        %v865 = vunpack.c.l.b16 %v595
        %v866 = vunpack.c.h.b16 %v595
        %v867 = vunpack.c.l.b16 %v596
        %v868 = vunpack.c.h.b16 %v596
        %v869 = vunpack.c.l.b16 %v597
        %v870 = vunpack.c.h.b16 %v597
        %v871 = vunpack.c.l.b16 %v598
        %v872 = vunpack.c.h.b16 %v598
        %v873 = vunpack.c.l.b16 %v599
        %v874 = vunpack.c.h.b16 %v599
        %v875 = vunpack.c.l.b16 %v600
        %v876 = vunpack.c.h.b16 %v600
        %v877 = vunpack.c.l.b16 %v601
        %v878 = vunpack.c.h.b16 %v601
        %v879 = vunpack.c.l.b16 %v602
        %v880 = vunpack.c.h.b16 %v602
        %v881 = vunpack.c.l.b16 %v603
        %v882 = vunpack.c.h.b16 %v603
        %v883 = vunpack.c.l.b16 %v604
        %v884 = vunpack.c.h.b16 %v604
        %v885 = vunpack.c.l.b16 %v605
        %v886 = vunpack.c.h.b16 %v605
        %v887 = vunpack.c.l.b16 %v606
        %v888 = vunpack.c.h.b16 %v606
        %v889 = vunpack.c.l.b16 %v607
        %v890 = vunpack.c.h.b16 %v607
        %v891 = vunpack.c.l.b16 %v608
        %v892 = vunpack.c.h.b16 %v608
        %v893 = vunpack.c.l.b16 %v609
        %v894 = vunpack.c.h.b16 %v609
        %v895 = vunpack.c.l.b16 %v610
        %v896 = vunpack.c.h.b16 %v610
        %v897 = vunpack.c.l.b16 %v611
        %v898 = vunpack.c.h.b16 %v611
        %v899 = vunpack.c.l.b16 %v612
        %v900 = vunpack.c.h.b16 %v612
        %v901 = vunpack.c.l.b16 %v613
        %v902 = vunpack.c.h.b16 %v613
        %v903 = vunpack.c.l.b16 %v614
        %v904 = vunpack.c.h.b16 %v614
        %v905 = vunpack.c.l.b16 %v615
        %v906 = vunpack.c.h.b16 %v615
        %v907 = vunpack.c.l.b16 %v616
        %v908 = vunpack.c.h.b16 %v616
        %v909 = vunpack.c.l.b16 %v617
        %v910 = vunpack.c.h.b16 %v617
        %v911 = vunpack.c.l.b16 %v618
        %v912 = vunpack.c.h.b16 %v618
        %v913 = vunpack.c.l.b16 %v619
        %v914 = vunpack.c.h.b16 %v619
        %v915 = vunpack.c.l.b16 %v620
        %v916 = vunpack.c.h.b16 %v620
        %v917 = vunpack.c.l.b16 %v621
        %v918 = vunpack.c.h.b16 %v621
        %v919 = vunpack.c.l.b16 %v622
        %v920 = vunpack.c.h.b16 %v622
        %v921 = vunpack.c.l.b16 %v623
        %v922 = vunpack.c.h.b16 %v623
        %v923 = vunpack.c.l.b16 %v624
        %v924 = vunpack.c.h.b16 %v624
        %v925 = vpack.c.b16 %v731, %v729
        %v926 = vpack.c.b16 %v732, %v730
        %v927 = vpack.c.b16 %v735, %v733
        %v928 = vpack.c.b16 %v736, %v734
        %v929 = vpack.c.b16 %v739, %v737
        %v930 = vpack.c.b16 %v740, %v738
        %v931 = vpack.c.b16 %v743, %v741
        %v932 = vpack.c.b16 %v744, %v742
        %v933 = vpack.c.b16 %v747, %v745
        %v934 = vpack.c.b16 %v748, %v746
        %v935 = vpack.c.b16 %v751, %v749
        %v936 = vpack.c.b16 %v752, %v750
        %v937 = vpack.c.b16 %v755, %v753
        %v938 = vpack.c.b16 %v756, %v754
        %v939 = vpack.c.b16 %v759, %v757
        %v940 = vpack.c.b16 %v760, %v758
        %v941 = vpack.c.b16 %v763, %v761
        %v942 = vpack.c.b16 %v764, %v762
        %v943 = vpack.c.b16 %v767, %v765
        %v944 = vpack.c.b16 %v768, %v766
        %v945 = vpack.c.b16 %v771, %v769
        %v946 = vpack.c.b16 %v772, %v770
        %v947 = vpack.c.b16 %v775, %v773
        %v948 = vpack.c.b16 %v776, %v774
        %v949 = vpack.c.b16 %v779, %v777
        %v950 = vpack.c.b16 %v780, %v778
        %v951 = vpack.c.b16 %v783, %v781
        %v952 = vpack.c.b16 %v784, %v782
        %v953 = vpack.c.b16 %v787, %v785
        %v954 = vpack.c.b16 %v788, %v786
        %v955 = vpack.c.b16 %v791, %v789
        %v956 = vpack.c.b16 %v792, %v790
        %v957 = vpack.c.b16 %v795, %v793
        %v958 = vpack.c.b16 %v796, %v794
        %v959 = vpack.c.b16 %v799, %v797
        %v960 = vpack.c.b16 %v800, %v798
        %v961 = vpack.c.b16 %v803, %v801
        %v962 = vpack.c.b16 %v804, %v802
        %v963 = vpack.c.b16 %v807, %v805
        %v964 = vpack.c.b16 %v808, %v806
        %v965 = vpack.c.b16 %v811, %v809
        %v966 = vpack.c.b16 %v812, %v810
        %v967 = vpack.c.b16 %v815, %v813
        %v968 = vpack.c.b16 %v816, %v814
        %v969 = vpack.c.b16 %v819, %v817
        %v970 = vpack.c.b16 %v820, %v818
        %v971 = vpack.c.b16 %v823, %v821
        %v972 = vpack.c.b16 %v824, %v822
        %v973 = vpack.c.b16 %v827, %v825
        %v974 = vpack.c.b16 %v828, %v826
        %v975 = vpack.c.b16 %v831, %v829
        %v976 = vpack.c.b16 %v832, %v830
        %v977 = vpack.c.b16 %v835, %v833
        %v978 = vpack.c.b16 %v836, %v834
        %v979 = vpack.c.b16 %v839, %v837
        %v980 = vpack.c.b16 %v840, %v838
        %v981 = vpack.c.b16 %v843, %v841
        %v982 = vpack.c.b16 %v844, %v842
        %v983 = vpack.c.b16 %v847, %v845
        %v984 = vpack.c.b16 %v848, %v846
        %v985 = vpack.c.b16 %v851, %v849
        %v986 = vpack.c.b16 %v852, %v850
        %v987 = vpack.c.b16 %v855, %v853
        %v988 = vpack.c.b16 %v856, %v854
        %v989 = vpack.c.b16 %v859, %v857
        %v990 = vpack.c.b16 %v860, %v858
        %v991 = vpack.c.b16 %v863, %v861
        %v992 = vpack.c.b16 %v864, %v862
        %v993 = vpack.c.b16 %v867, %v865
        %v994 = vpack.c.b16 %v868, %v866
        %v995 = vpack.c.b16 %v871, %v869
        %v996 = vpack.c.b16 %v872, %v870
        %v997 = vpack.c.b16 %v875, %v873
        %v998 = vpack.c.b16 %v876, %v874
        %v999 = vpack.c.b16 %v879, %v877
        %v1000 = vpack.c.b16 %v880, %v878
        %v1001 = vpack.c.b16 %v883, %v881
        %v1002 = vpack.c.b16 %v884, %v882
        %v1003 = vpack.c.b16 %v887, %v885
        %v1004 = vpack.c.b16 %v888, %v886
        %v1005 = vpack.c.b16 %v891, %v889
        %v1006 = vpack.c.b16 %v892, %v890
        %v1007 = vpack.c.b16 %v895, %v893
        %v1008 = vpack.c.b16 %v896, %v894
        %v1009 = vpack.c.b16 %v899, %v897
        %v1010 = vpack.c.b16 %v900, %v898
        %v1011 = vpack.c.b16 %v903, %v901
        %v1012 = vpack.c.b16 %v904, %v902
        %v1013 = vpack.c.b16 %v907, %v905
        %v1014 = vpack.c.b16 %v908, %v906
        %v1015 = vpack.c.b16 %v911, %v909
        %v1016 = vpack.c.b16 %v912, %v910
        %v1017 = vpack.c.b16 %v915, %v913
        %v1018 = vpack.c.b16 %v916, %v914
        %v1019 = vpack.c.b16 %v919, %v917
        %v1020 = vpack.c.b16 %v920, %v918
        %v1021 = vpack.c.b16 %v923, %v921
        %v1022 = vpack.c.b16 %v924, %v922
        %vm1121 = vcmask 130048
        %v1123 = vsel %vm1121, %v526, 0
        %1125 = vmatpush.bf16.msra.mxu0 %v939
        %1126 = vmatpush.bf16.msra.mxu0 %v937
        %1127 = vmatpush.bf16.msra.mxu0 %v935
        %1128 = vmatpush.bf16.msra.mxu0 %v933
        %1129 = vmatpush.bf16.msra.mxu0 %v931
        %1130 = vmatpush.bf16.msra.mxu0 %v929
        %1131 = vmatpush.bf16.msra.mxu0 %v927
        %1132 = vmatpush.bf16.msra.mxu0 %v925
        %1133 = vmatmul.bf16.gmra.mxu0 %v520
        %v1134 = vpop.f32.mrf.mxu0
        %v1135 = vadd.f32 %v627, %v1134
        %v1136 = vpop.f32.mrf.mxu0
        %v1137 = vadd.f32 %v627, %v1136
        %1138 = vdwg.mxu0
        %1139 = vmatpush.bf16.msra.mxu0 %v955
        %1140 = vmatpush.bf16.msra.mxu0 %v953
        %1141 = vmatpush.bf16.msra.mxu0 %v951
        %1142 = vmatpush.bf16.msra.mxu0 %v949
        %1143 = vmatpush.bf16.msra.mxu0 %v947
        %1144 = vmatpush.bf16.msra.mxu0 %v945
        %1145 = vmatpush.bf16.msra.mxu0 %v943
        %1146 = vmatpush.bf16.msra.mxu0 %v941
        %1147 = vmatmul.bf16.gmra.mxu0 %v521
        %v1148 = vpop.f32.mrf.mxu0
        %v1149 = vadd.f32 %v1135, %v1148
        %v1150 = vpop.f32.mrf.mxu0
        %v1151 = vadd.f32 %v1137, %v1150
        %1152 = vdwg.mxu0
        %1153 = vmatpush.bf16.msra.mxu0 %v971
        %1154 = vmatpush.bf16.msra.mxu0 %v969
        %1155 = vmatpush.bf16.msra.mxu0 %v967
        %1156 = vmatpush.bf16.msra.mxu0 %v965
        %1157 = vmatpush.bf16.msra.mxu0 %v963
        %1158 = vmatpush.bf16.msra.mxu0 %v961
        %1159 = vmatpush.bf16.msra.mxu0 %v959
        %1160 = vmatpush.bf16.msra.mxu0 %v957
        %1161 = vmatmul.bf16.gmra.mxu0 %v522
        %v1162 = vpop.f32.mrf.mxu0
        %v1163 = vadd.f32 %v1149, %v1162
        %v1164 = vpop.f32.mrf.mxu0
        %v1165 = vadd.f32 %v1151, %v1164
        %1166 = vdwg.mxu0
        %1167 = vmatpush.bf16.msra.mxu0 %v987
        %1168 = vmatpush.bf16.msra.mxu0 %v985
        %1169 = vmatpush.bf16.msra.mxu0 %v983
        %1170 = vmatpush.bf16.msra.mxu0 %v981
        %1171 = vmatpush.bf16.msra.mxu0 %v979
        %1172 = vmatpush.bf16.msra.mxu0 %v977
        %1173 = vmatpush.bf16.msra.mxu0 %v975
        %1174 = vmatpush.bf16.msra.mxu0 %v973
        %1175 = vmatmul.bf16.gmra.mxu0 %v523
        %v1176 = vpop.f32.mrf.mxu0
        %v1177 = vadd.f32 %v1163, %v1176
        %v1178 = vpop.f32.mrf.mxu0
        %v1179 = vadd.f32 %v1165, %v1178
        %1180 = vdwg.mxu0
        %1181 = vmatpush.bf16.msra.mxu0 %v1003
        %1182 = vmatpush.bf16.msra.mxu0 %v1001
        %1183 = vmatpush.bf16.msra.mxu0 %v999
        %1184 = vmatpush.bf16.msra.mxu0 %v997
        %1185 = vmatpush.bf16.msra.mxu0 %v995
        %1186 = vmatpush.bf16.msra.mxu0 %v993
        %1187 = vmatpush.bf16.msra.mxu0 %v991
        %1188 = vmatpush.bf16.msra.mxu0 %v989
        %1189 = vmatmul.bf16.gmra.mxu0 %v524
        %v1190 = vpop.f32.mrf.mxu0
        %v1191 = vadd.f32 %v1177, %v1190
        %v1192 = vpop.f32.mrf.mxu0
        %v1193 = vadd.f32 %v1179, %v1192
        %1194 = vdwg.mxu0
        %1195 = vmatpush.bf16.msra.mxu0 %v1019
        %1196 = vmatpush.bf16.msra.mxu0 %v1017
        %1197 = vmatpush.bf16.msra.mxu0 %v1015
        %1198 = vmatpush.bf16.msra.mxu0 %v1013
        %1199 = vmatpush.bf16.msra.mxu0 %v1011
        %1200 = vmatpush.bf16.msra.mxu0 %v1009
        %1201 = vmatpush.bf16.msra.mxu0 %v1007
        %1202 = vmatpush.bf16.msra.mxu0 %v1005
        %1203 = vmatmul.bf16.gmra.mxu0 %v525
        %v1204 = vpop.f32.mrf.mxu0
        %v1205 = vadd.f32 %v1191, %v1204
        %v1206 = vpop.f32.mrf.mxu0
        %v1207 = vadd.f32 %v1193, %v1206
        %1208 = vdwg.mxu0
        %1209 = vmatpush.bf16.msra.mxu0 0
        %1210 = vmatpush.bf16.msra.mxu0 0
        %1211 = vmatpush.bf16.msra.mxu0 0
        %1212 = vmatpush.bf16.msra.mxu0 0
        %1213 = vmatpush.bf16.msra.mxu0 0
        %1214 = vmatpush.bf16.msra.mxu0 0
        %1215 = vmatpush.bf16.msra.mxu0 0
        %1216 = vmatpush.bf16.msra.mxu0 %v1021
        %1217 = vmatmul.bf16.gmra.mxu0 %v1123
        %v1218 = vpop.f32.mrf.mxu0
        %v1219 = vadd.f32 %v1205, %v1218
        %v1220 = vpop.f32.mrf.mxu0
        %v1221 = vadd.f32 %v1207, %v1220
        %1222 = vdwg.mxu0
        %1223 = vmatpush.bf16.msra.mxu0 %v940
        %1224 = vmatpush.bf16.msra.mxu0 %v938
        %1225 = vmatpush.bf16.msra.mxu0 %v936
        %1226 = vmatpush.bf16.msra.mxu0 %v934
        %1227 = vmatpush.bf16.msra.mxu0 %v932
        %1228 = vmatpush.bf16.msra.mxu0 %v930
        %1229 = vmatpush.bf16.msra.mxu0 %v928
        %1230 = vmatpush.bf16.msra.mxu0 %v926
        %1231 = vmatmul.bf16.gmra.mxu0 %v520
        %v1232 = vpop.f32.mrf.mxu0
        %v1233 = vadd.f32 %v628, %v1232
        %v1234 = vpop.f32.mrf.mxu0
        %v1235 = vadd.f32 %v628, %v1234
        %1236 = vdwg.mxu0
        %1237 = vmatpush.bf16.msra.mxu0 %v956
        %1238 = vmatpush.bf16.msra.mxu0 %v954
        %1239 = vmatpush.bf16.msra.mxu0 %v952
        %1240 = vmatpush.bf16.msra.mxu0 %v950
        %1241 = vmatpush.bf16.msra.mxu0 %v948
        %1242 = vmatpush.bf16.msra.mxu0 %v946
        %1243 = vmatpush.bf16.msra.mxu0 %v944
        %1244 = vmatpush.bf16.msra.mxu0 %v942
        %1245 = vmatmul.bf16.gmra.mxu0 %v521
        %v1246 = vpop.f32.mrf.mxu0
        %v1247 = vadd.f32 %v1233, %v1246
        %v1248 = vpop.f32.mrf.mxu0
        %v1249 = vadd.f32 %v1235, %v1248
        %1250 = vdwg.mxu0
        %1251 = vmatpush.bf16.msra.mxu0 %v972
        %1252 = vmatpush.bf16.msra.mxu0 %v970
        %1253 = vmatpush.bf16.msra.mxu0 %v968
        %1254 = vmatpush.bf16.msra.mxu0 %v966
        %1255 = vmatpush.bf16.msra.mxu0 %v964
        %1256 = vmatpush.bf16.msra.mxu0 %v962
        %1257 = vmatpush.bf16.msra.mxu0 %v960
        %1258 = vmatpush.bf16.msra.mxu0 %v958
        %1259 = vmatmul.bf16.gmra.mxu0 %v522
        %v1260 = vpop.f32.mrf.mxu0
        %v1261 = vadd.f32 %v1247, %v1260
        %v1262 = vpop.f32.mrf.mxu0
        %v1263 = vadd.f32 %v1249, %v1262
        %1264 = vdwg.mxu0
        %1265 = vmatpush.bf16.msra.mxu0 %v988
        %1266 = vmatpush.bf16.msra.mxu0 %v986
        %1267 = vmatpush.bf16.msra.mxu0 %v984
        %1268 = vmatpush.bf16.msra.mxu0 %v982
        %1269 = vmatpush.bf16.msra.mxu0 %v980
        %1270 = vmatpush.bf16.msra.mxu0 %v978
        %1271 = vmatpush.bf16.msra.mxu0 %v976
        %1272 = vmatpush.bf16.msra.mxu0 %v974
        %1273 = vmatmul.bf16.gmra.mxu0 %v523
        %v1274 = vpop.f32.mrf.mxu0
        %v1275 = vadd.f32 %v1261, %v1274
        %v1276 = vpop.f32.mrf.mxu0
        %v1277 = vadd.f32 %v1263, %v1276
        %1278 = vdwg.mxu0
        %1279 = vmatpush.bf16.msra.mxu0 %v1004
        %1280 = vmatpush.bf16.msra.mxu0 %v1002
        %1281 = vmatpush.bf16.msra.mxu0 %v1000
        %1282 = vmatpush.bf16.msra.mxu0 %v998
        %1283 = vmatpush.bf16.msra.mxu0 %v996
        %1284 = vmatpush.bf16.msra.mxu0 %v994
        %1285 = vmatpush.bf16.msra.mxu0 %v992
        %1286 = vmatpush.bf16.msra.mxu0 %v990
        %1287 = vmatmul.bf16.gmra.mxu0 %v524
        %v1288 = vpop.f32.mrf.mxu0
        %v1289 = vadd.f32 %v1275, %v1288
        %v1290 = vpop.f32.mrf.mxu0
        %v1291 = vadd.f32 %v1277, %v1290
        %1292 = vdwg.mxu0
        %1293 = vmatpush.bf16.msra.mxu0 %v1020
        %1294 = vmatpush.bf16.msra.mxu0 %v1018
        %1295 = vmatpush.bf16.msra.mxu0 %v1016
        %1296 = vmatpush.bf16.msra.mxu0 %v1014
        %1297 = vmatpush.bf16.msra.mxu0 %v1012
        %1298 = vmatpush.bf16.msra.mxu0 %v1010
        %1299 = vmatpush.bf16.msra.mxu0 %v1008
        %1300 = vmatpush.bf16.msra.mxu0 %v1006
        %1301 = vmatmul.bf16.gmra.mxu0 %v525
        %v1302 = vpop.f32.mrf.mxu0
        %v1303 = vadd.f32 %v1289, %v1302
        %v1304 = vpop.f32.mrf.mxu0
        %v1305 = vadd.f32 %v1291, %v1304
        %1306 = vdwg.mxu0
        %1307 = vmatpush.bf16.msra.mxu0 0
        %1308 = vmatpush.bf16.msra.mxu0 0
        %1309 = vmatpush.bf16.msra.mxu0 0
        %1310 = vmatpush.bf16.msra.mxu0 0
        %1311 = vmatpush.bf16.msra.mxu0 0
        %1312 = vmatpush.bf16.msra.mxu0 0
        %1313 = vmatpush.bf16.msra.mxu0 0
        %1314 = vmatpush.bf16.msra.mxu0 %v1022
        %1315 = vmatmul.bf16.gmra.mxu0 %v1123
        %v1316 = vpop.f32.mrf.mxu0
        %v1317 = vadd.f32 %v1303, %v1316
        %v1318 = vpop.f32.mrf.mxu0
        %v1319 = vadd.f32 %v1305, %v1318
        %1320 = vdwg.mxu0
        %v1321 = vmax.f32 %v1219, 0.0
        %v1322 = vmax.f32 %v1317, 0.0
        %v1323 = vmax.f32 %v1221, 0.0
        %v1324 = vmax.f32 %v1319, 0.0
        %v1325 = vpack.c.bf16 %v1323, %v1321
        %v1326 = vpack.c.bf16 %v1324, %v1322
        %v1327 = vld [vmem:[#allocation8] sm:$0xf]
        %v1328 = vld [vmem:[#allocation8 + $0x4] sm:$0xf]
        %v1329 = vld [vmem:[#allocation8 + $0x8] sm:$0xf]
        %v1330 = vld [vmem:[#allocation8 + $0xc] sm:$0xf]
        %v1331 = vld [vmem:[#allocation8 + $0x10] sm:$0xf]
        %v1332 = vld [vmem:[#allocation8 + $0x14] sm:$0xf]
        %v1333 = vld [vmem:[#allocation8 + $0x18] sm:$0xf]
        %v1334 = vld [vmem:[#allocation8 + $0x1c] sm:$0xf]
        %v1335 = vld [vmem:[#allocation8 + $0x20] sm:$0xf]
        %v1336 = vld [vmem:[#allocation8 + $0x24] sm:$0xf]
        %v1337 = vld [vmem:[#allocation8 + $0x28] sm:$0xf]
        %v1338 = vld [vmem:[#allocation8 + $0x2c] sm:$0xf]
        %v1339 = vld [vmem:[#allocation8 + $0x30] sm:$0xf]
        %v1340 = vld [vmem:[#allocation8 + $0x34] sm:$0xf]
        %v1341 = vld [vmem:[#allocation8 + $0x38] sm:$0xf]
        %v1342 = vld [vmem:[#allocation8 + $0x3c] sm:$0xf]
        %v1343 = vld [vmem:[#allocation8 + $0x40] sm:$0xf]
        %v1344 = vld [vmem:[#allocation8 + $0x44] sm:$0xf]
        %v1345 = vld [vmem:[#allocation8 + $0x48] sm:$0xf]
        %v1346 = vld [vmem:[#allocation8 + $0x4c] sm:$0xf]
        %v1347 = vld [vmem:[#allocation8 + $0x50] sm:$0xf]
        %v1348 = vld [vmem:[#allocation8 + $0x54] sm:$0xf]
        %v1349 = vld [vmem:[#allocation8 + $0x58] sm:$0xf]
        %v1350 = vld [vmem:[#allocation8 + $0x5c] sm:$0xf]
        %v1351 = vld [vmem:[#allocation8 + $0x60] sm:$0xf]
        %v1352 = vld [vmem:[#allocation8 + $0x64] sm:$0xf]
        %v1353 = vld [vmem:[#allocation8 + $0x68] sm:$0xf]
        %v1354 = vld [vmem:[#allocation8 + $0x6c] sm:$0xf]
        %v1355 = vld [vmem:[#allocation8 + $0x70] sm:$0xf]
        %v1356 = vld [vmem:[#allocation8 + $0x74] sm:$0xf]
        %v1357 = vld [vmem:[#allocation8 + $0x78] sm:$0xf]
        %v1358 = vld [vmem:[#allocation8 + $0x7c] sm:$0xf]
        %v1359 = vld [vmem:[#allocation10] sm:$0x1]
        %v1361 = vperm.slane %v1359, 0
        %v1395 = vunpack.c.l.b16 %v1327
        %v1396 = vunpack.c.l.b16 %v1328
        %v1397 = vunpack.c.l.b16 %v1329
        %v1398 = vunpack.c.l.b16 %v1330
        %v1399 = vunpack.c.l.b16 %v1331
        %v1400 = vunpack.c.l.b16 %v1332
        %v1401 = vunpack.c.l.b16 %v1333
        %v1402 = vunpack.c.l.b16 %v1334
        %v1403 = vunpack.c.l.b16 %v1335
        %v1404 = vunpack.c.l.b16 %v1336
        %v1405 = vunpack.c.l.b16 %v1337
        %v1406 = vunpack.c.l.b16 %v1338
        %v1407 = vunpack.c.l.b16 %v1339
        %v1408 = vunpack.c.l.b16 %v1340
        %v1409 = vunpack.c.l.b16 %v1341
        %v1410 = vunpack.c.l.b16 %v1342
        %v1411 = vunpack.c.l.b16 %v1343
        %v1412 = vunpack.c.l.b16 %v1344
        %v1413 = vunpack.c.l.b16 %v1345
        %v1414 = vunpack.c.l.b16 %v1346
        %v1415 = vunpack.c.l.b16 %v1347
        %v1416 = vunpack.c.l.b16 %v1348
        %v1417 = vunpack.c.l.b16 %v1349
        %v1418 = vunpack.c.l.b16 %v1350
        %v1419 = vunpack.c.l.b16 %v1351
        %v1420 = vunpack.c.l.b16 %v1352
        %v1421 = vunpack.c.l.b16 %v1353
        %v1422 = vunpack.c.l.b16 %v1354
        %v1423 = vunpack.c.l.b16 %v1355
        %v1424 = vunpack.c.l.b16 %v1356
        %v1425 = vunpack.c.l.b16 %v1357
        %v1426 = vunpack.c.l.b16 %v1358
        %v1427 = vpack.c.b16 %v1396, %v1395
        %v1428 = vpack.c.b16 %v1398, %v1397
        %v1429 = vpack.c.b16 %v1400, %v1399
        %v1430 = vpack.c.b16 %v1402, %v1401
        %v1431 = vpack.c.b16 %v1404, %v1403
        %v1432 = vpack.c.b16 %v1406, %v1405
        %v1433 = vpack.c.b16 %v1408, %v1407
        %v1434 = vpack.c.b16 %v1410, %v1409
        %v1435 = vpack.c.b16 %v1412, %v1411
        %v1436 = vpack.c.b16 %v1414, %v1413
        %v1437 = vpack.c.b16 %v1416, %v1415
        %v1438 = vpack.c.b16 %v1418, %v1417
        %v1439 = vpack.c.b16 %v1420, %v1419
        %v1440 = vpack.c.b16 %v1422, %v1421
        %v1441 = vpack.c.b16 %v1424, %v1423
        %v1442 = vpack.c.b16 %v1426, %v1425
        %1459 = vmatpush.bf16.msra.mxu0 %v1434
        %1460 = vmatpush.bf16.msra.mxu0 %v1433
        %1461 = vmatpush.bf16.msra.mxu0 %v1432
        %1462 = vmatpush.bf16.msra.mxu0 %v1431
        %1463 = vmatpush.bf16.msra.mxu0 %v1430
        %1464 = vmatpush.bf16.msra.mxu0 %v1429
        %1465 = vmatpush.bf16.msra.mxu0 %v1428
        %1466 = vmatpush.bf16.msra.mxu0 %v1427
        %1467 = vmatmul.bf16.gmra.mxu0 %v1325
        %v1468 = vpop.f32.mrf.mxu0
        %v1469 = vadd.f32 %v1361, %v1468
        %v1470 = vpop.f32.mrf.mxu0
        %v1471 = vadd.f32 %v1361, %v1470
        %1472 = vdwg.mxu0
        %1473 = vmatpush.bf16.msra.mxu0 %v1442
        %1474 = vmatpush.bf16.msra.mxu0 %v1441
        %1475 = vmatpush.bf16.msra.mxu0 %v1440
        %1476 = vmatpush.bf16.msra.mxu0 %v1439
        %1477 = vmatpush.bf16.msra.mxu0 %v1438
        %1478 = vmatpush.bf16.msra.mxu0 %v1437
        %1479 = vmatpush.bf16.msra.mxu0 %v1436
        %1480 = vmatpush.bf16.msra.mxu0 %v1435
        %1481 = vmatmul.bf16.gmra.mxu0 %v1326
        %v1482 = vpop.f32.mrf.mxu0
        %v1483 = vadd.f32 %v1469, %v1482
        %v1484 = vpop.f32.mrf.mxu0
        %v1485 = vadd.f32 %v1471, %v1484
        %1486 = vdwg.mxu0
        %v1487 = vmax.f32 %v1483, 0.0
        %v1488 = vmax.f32 %v1485, 0.0
        %v1489 = vpack.c.bf16 %v1487, %v1487
        %v1490 = vpack.c.bf16 %v1488, %v1488
        %1491 = vst [vmem:[%s494] sm:$0xf] %v1489
        %1492 = vst [vmem:[%s494 + $0x4] sm:$0xf] %v1490
        %v1493 = vld [vmem:[#allocation11] sm:$0xff]
        %v1494 = vld [vmem:[#allocation11 + $0x8] sm:$0xff]
        %v1495 = vld [vmem:[#allocation11 + $0x10] sm:$0xff]
        %v1496 = vld [vmem:[#allocation11 + $0x18] sm:$0xff]
        %v1497 = vld [vmem:[#allocation11 + $0x20] sm:$0xff]
        %v1498 = vld [vmem:[#allocation11 + $0x28] sm:$0xff]
        %v1499 = vld [vmem:[#allocation11 + $0x30] sm:$0xff]
        %v1500 = vld [vmem:[#allocation11 + $0x38] sm:$0xff]
        %v1501 = vld [vmem:[#allocation11 + $0x40] sm:$0xff]
        %v1502 = vld [vmem:[#allocation11 + $0x48] sm:$0xff]
        %v1503 = vld [vmem:[#allocation11 + $0x50] sm:$0xff]
        %v1504 = vld [vmem:[#allocation11 + $0x58] sm:$0xff]
        %v1505 = vld [vmem:[#allocation11 + $0x60] sm:$0xff]
        %v1506 = vld [vmem:[#allocation11 + $0x68] sm:$0xff]
        %v1507 = vld [vmem:[#allocation11 + $0x70] sm:$0xff]
        %v1508 = vld [vmem:[#allocation11 + $0x78] sm:$0xff]
        %v1509 = vld [vmem:[%s6] sm:$0x3]
        %v1511 = vperm.slane %v1509, 0
        %v1512 = vperm.slane %v1509, 1
        %v1517 = vunpack.c.l.b16 %v1489
        %v1518 = vunpack.c.l.b16 %v1490
        %v1519 = vpack.c.b16 %v1518, %v1517
        %v1537 = vunpack.c.l.b16 %v1493
        %v1538 = vunpack.c.h.b16 %v1493
        %v1539 = vunpack.c.l.b16 %v1494
        %v1540 = vunpack.c.h.b16 %v1494
        %v1541 = vunpack.c.l.b16 %v1495
        %v1542 = vunpack.c.h.b16 %v1495
        %v1543 = vunpack.c.l.b16 %v1496
        %v1544 = vunpack.c.h.b16 %v1496
        %v1545 = vunpack.c.l.b16 %v1497
        %v1546 = vunpack.c.h.b16 %v1497
        %v1547 = vunpack.c.l.b16 %v1498
        %v1548 = vunpack.c.h.b16 %v1498
        %v1549 = vunpack.c.l.b16 %v1499
        %v1550 = vunpack.c.h.b16 %v1499
        %v1551 = vunpack.c.l.b16 %v1500
        %v1552 = vunpack.c.h.b16 %v1500
        %v1553 = vunpack.c.l.b16 %v1501
        %v1554 = vunpack.c.h.b16 %v1501
        %v1555 = vunpack.c.l.b16 %v1502
        %v1556 = vunpack.c.h.b16 %v1502
        %v1557 = vunpack.c.l.b16 %v1503
        %v1558 = vunpack.c.h.b16 %v1503
        %v1559 = vunpack.c.l.b16 %v1504
        %v1560 = vunpack.c.h.b16 %v1504
        %v1561 = vunpack.c.l.b16 %v1505
        %v1562 = vunpack.c.h.b16 %v1505
        %v1563 = vunpack.c.l.b16 %v1506
        %v1564 = vunpack.c.h.b16 %v1506
        %v1565 = vunpack.c.l.b16 %v1507
        %v1566 = vunpack.c.h.b16 %v1507
        %v1567 = vunpack.c.l.b16 %v1508
        %v1568 = vunpack.c.h.b16 %v1508
        %v1569 = vpack.c.b16 %v1539, %v1537
        %v1570 = vpack.c.b16 %v1540, %v1538
        %v1571 = vpack.c.b16 %v1543, %v1541
        %v1572 = vpack.c.b16 %v1544, %v1542
        %v1573 = vpack.c.b16 %v1547, %v1545
        %v1574 = vpack.c.b16 %v1548, %v1546
        %v1575 = vpack.c.b16 %v1551, %v1549
        %v1576 = vpack.c.b16 %v1552, %v1550
        %v1577 = vpack.c.b16 %v1555, %v1553
        %v1578 = vpack.c.b16 %v1556, %v1554
        %v1579 = vpack.c.b16 %v1559, %v1557
        %v1580 = vpack.c.b16 %v1560, %v1558
        %v1581 = vpack.c.b16 %v1563, %v1561
        %v1582 = vpack.c.b16 %v1564, %v1562
        %v1583 = vpack.c.b16 %v1567, %v1565
        %v1584 = vpack.c.b16 %v1568, %v1566
        %1601 = vmatpush.bf16.msra.mxu0 %v1583
        %1602 = vmatpush.bf16.msra.mxu0 %v1581
        %1603 = vmatpush.bf16.msra.mxu0 %v1579
        %1604 = vmatpush.bf16.msra.mxu0 %v1577
        %1605 = vmatpush.bf16.msra.mxu0 %v1575
        %1606 = vmatpush.bf16.msra.mxu0 %v1573
        %1607 = vmatpush.bf16.msra.mxu0 %v1571
        %1608 = vmatpush.bf16.msra.mxu0 %v1569
        %1609 = vmatmul.bf16.gmra.mxu0 %v1519
        %v1610 = vpop.f32.mrf.mxu0
        %v1611 = vadd.f32 %v1511, %v1610
        %v1612 = vpop.f32.mrf.mxu0
        %v1613 = vadd.f32 %v1511, %v1612
        %1614 = vdwg.mxu0
        %1615 = vmatpush.bf16.msra.mxu0 %v1584
        %1616 = vmatpush.bf16.msra.mxu0 %v1582
        %1617 = vmatpush.bf16.msra.mxu0 %v1580
        %1618 = vmatpush.bf16.msra.mxu0 %v1578
        %1619 = vmatpush.bf16.msra.mxu0 %v1576
        %1620 = vmatpush.bf16.msra.mxu0 %v1574
        %1621 = vmatpush.bf16.msra.mxu0 %v1572
        %1622 = vmatpush.bf16.msra.mxu0 %v1570
        %1623 = vmatmul.bf16.gmra.mxu0 %v1519
        %v1624 = vpop.f32.mrf.mxu0
        %v1625 = vadd.f32 %v1512, %v1624
        %v1626 = vpop.f32.mrf.mxu0
        %v1627 = vadd.f32 %v1512, %v1626
        %1628 = vdwg.mxu0
        %v1629 = vmax.f32 %v1611, 0.0
        %v1630 = vmax.f32 %v1625, 0.0
        %v1631 = vmax.f32 %v1613, 0.0
        %v1632 = vmax.f32 %v1627, 0.0
        %v1633 = vpack.c.bf16 %v1631, %v1629
        %v1634 = vpack.c.bf16 %v1632, %v1630
        %v1635 = vld [vmem:[#allocation13] sm:$0xff]
        %v1636 = vld [vmem:[#allocation13 + $0x8] sm:$0xff]
        %v1637 = vld [vmem:[#allocation13 + $0x10] sm:$0xff]
        %v1638 = vld [vmem:[#allocation13 + $0x18] sm:$0xf]
        %v1639 = vld [vmem:[#allocation13 + $0x1c] sm:$0xff]
        %v1640 = vld [vmem:[#allocation13 + $0x24] sm:$0xff]
        %v1641 = vld [vmem:[#allocation13 + $0x2c] sm:$0xff]
        %v1642 = vld [vmem:[#allocation13 + $0x34] sm:$0xf]
        %v1643 = vld [vmem:[#allocation13 + $0x38] sm:$0xff]
        %v1644 = vld [vmem:[#allocation13 + $0x40] sm:$0xff]
        %v1645 = vld [vmem:[#allocation13 + $0x48] sm:$0xff]
        %v1646 = vld [vmem:[#allocation13 + $0x50] sm:$0xf]
        %v1647 = vld [vmem:[#allocation13 + $0x54] sm:$0xff]
        %v1648 = vld [vmem:[#allocation13 + $0x5c] sm:$0xff]
        %v1649 = vld [vmem:[#allocation13 + $0x64] sm:$0xff]
        %v1650 = vld [vmem:[#allocation13 + $0x6c] sm:$0xf]
        %v1651 = vld [vmem:[#allocation13 + $0x70] sm:$0xff]
        %v1652 = vld [vmem:[#allocation13 + $0x78] sm:$0xff]
        %v1653 = vld [vmem:[#allocation13 + $0x80] sm:$0xff]
        %v1654 = vld [vmem:[#allocation13 + $0x88] sm:$0xf]
        %v1655 = vld [vmem:[#allocation13 + $0x8c] sm:$0xff]
        %v1656 = vld [vmem:[#allocation13 + $0x94] sm:$0xff]
        %v1657 = vld [vmem:[#allocation13 + $0x9c] sm:$0xff]
        %v1658 = vld [vmem:[#allocation13 + $0xa4] sm:$0xf]
        %v1659 = vld [vmem:[#allocation13 + $0xa8] sm:$0xff]
        %v1660 = vld [vmem:[#allocation13 + $0xb0] sm:$0xff]
        %v1661 = vld [vmem:[#allocation13 + $0xb8] sm:$0xff]
        %v1662 = vld [vmem:[#allocation13 + $0xc0] sm:$0xf]
        %v1663 = vld [vmem:[#allocation13 + $0xc4] sm:$0xff]
        %v1664 = vld [vmem:[#allocation13 + $0xcc] sm:$0xff]
        %v1665 = vld [vmem:[#allocation13 + $0xd4] sm:$0xff]
        %v1666 = vld [vmem:[#allocation13 + $0xdc] sm:$0xf]
        %v1667 = vld [vmem:[#allocation13 + $0xe0] sm:$0xff]
        %v1668 = vld [vmem:[#allocation13 + $0xe8] sm:$0xff]
        %v1669 = vld [vmem:[#allocation13 + $0xf0] sm:$0xff]
        %v1670 = vld [vmem:[#allocation13 + $0xf8] sm:$0xf]
        %v1671 = vld [vmem:[#allocation13 + $0xfc] sm:$0xff]
        %v1672 = vld [vmem:[#allocation13 + $0x104] sm:$0xff]
        %v1673 = vld [vmem:[#allocation13 + $0x10c] sm:$0xff]
        %v1674 = vld [vmem:[#allocation13 + $0x114] sm:$0xf]
        %v1675 = vld [vmem:[#allocation13 + $0x118] sm:$0xff]
        %v1676 = vld [vmem:[#allocation13 + $0x120] sm:$0xff]
        %v1677 = vld [vmem:[#allocation13 + $0x128] sm:$0xff]
        %v1678 = vld [vmem:[#allocation13 + $0x130] sm:$0xf]
        %v1679 = vld [vmem:[#allocation13 + $0x134] sm:$0xff]
        %v1680 = vld [vmem:[#allocation13 + $0x13c] sm:$0xff]
        %v1681 = vld [vmem:[#allocation13 + $0x144] sm:$0xff]
        %v1682 = vld [vmem:[#allocation13 + $0x14c] sm:$0xf]
        %v1683 = vld [vmem:[#allocation13 + $0x150] sm:$0xff]
        %v1684 = vld [vmem:[#allocation13 + $0x158] sm:$0xff]
        %v1685 = vld [vmem:[#allocation13 + $0x160] sm:$0xff]
        %v1686 = vld [vmem:[#allocation13 + $0x168] sm:$0xf]
        %v1687 = vld [vmem:[#allocation13 + $0x16c] sm:$0xff]
        %v1688 = vld [vmem:[#allocation13 + $0x174] sm:$0xff]
        %v1689 = vld [vmem:[#allocation13 + $0x17c] sm:$0xff]
        %v1690 = vld [vmem:[#allocation13 + $0x184] sm:$0xf]
        %v1691 = vld [vmem:[#allocation13 + $0x188] sm:$0xff]
        %v1692 = vld [vmem:[#allocation13 + $0x190] sm:$0xff]
        %v1693 = vld [vmem:[#allocation13 + $0x198] sm:$0xff]
        %v1694 = vld [vmem:[#allocation13 + $0x1a0] sm:$0xf]
        %v1695 = vld [vmem:[#allocation13 + $0x1a4] sm:$0xff]
        %v1696 = vld [vmem:[#allocation13 + $0x1ac] sm:$0xff]
        %v1697 = vld [vmem:[#allocation13 + $0x1b4] sm:$0xff]
        %v1698 = vld [vmem:[#allocation13 + $0x1bc] sm:$0xf]
        %v1699 = vld [vmem:[#allocation13 + $0x1c0] sm:$0xff]
        %v1700 = vld [vmem:[#allocation13 + $0x1c8] sm:$0xff]
        %v1701 = vld [vmem:[#allocation13 + $0x1d0] sm:$0xff]
        %v1702 = vld [vmem:[#allocation13 + $0x1d8] sm:$0xf]
        %v1703 = vld [vmem:[#allocation13 + $0x1dc] sm:$0xff]
        %v1704 = vld [vmem:[#allocation13 + $0x1e4] sm:$0xff]
        %v1705 = vld [vmem:[#allocation13 + $0x1ec] sm:$0xff]
        %v1706 = vld [vmem:[#allocation13 + $0x1f4] sm:$0xf]
        %v1707 = vld [vmem:[#allocation13 + $0x1f8] sm:$0xff]
        %v1708 = vld [vmem:[#allocation13 + $0x200] sm:$0xff]
        %v1709 = vld [vmem:[#allocation13 + $0x208] sm:$0xff]
        %v1710 = vld [vmem:[#allocation13 + $0x210] sm:$0xf]
        %v1711 = vld [vmem:[#allocation13 + $0x214] sm:$0xff]
        %v1712 = vld [vmem:[#allocation13 + $0x21c] sm:$0xff]
        %v1713 = vld [vmem:[#allocation13 + $0x224] sm:$0xff]
        %v1714 = vld [vmem:[#allocation13 + $0x22c] sm:$0xf]
        %v1715 = vld [vmem:[#allocation13 + $0x230] sm:$0xff]
        %v1716 = vld [vmem:[#allocation13 + $0x238] sm:$0xff]
        %v1717 = vld [vmem:[#allocation13 + $0x240] sm:$0xff]
        %v1718 = vld [vmem:[#allocation13 + $0x248] sm:$0xf]
        %v1719 = vld [vmem:[#allocation13 + $0x24c] sm:$0xff]
        %v1720 = vld [vmem:[#allocation13 + $0x254] sm:$0xff]
        %v1721 = vld [vmem:[#allocation13 + $0x25c] sm:$0xff]
        %v1722 = vld [vmem:[#allocation13 + $0x264] sm:$0xf]
        %v1723 = vld [vmem:[#allocation13 + $0x268] sm:$0xff]
        %v1724 = vld [vmem:[#allocation13 + $0x270] sm:$0xff]
        %v1725 = vld [vmem:[#allocation13 + $0x278] sm:$0xff]
        %v1726 = vld [vmem:[#allocation13 + $0x280] sm:$0xf]
        %v1727 = vld [vmem:[#allocation13 + $0x284] sm:$0xff]
        %v1728 = vld [vmem:[#allocation13 + $0x28c] sm:$0xff]
        %v1729 = vld [vmem:[#allocation13 + $0x294] sm:$0xff]
        %v1730 = vld [vmem:[#allocation13 + $0x29c] sm:$0xf]
        %v1731 = vld [vmem:[#allocation13 + $0x2a0] sm:$0xff]
        %v1732 = vld [vmem:[#allocation13 + $0x2a8] sm:$0xff]
        %v1733 = vld [vmem:[#allocation13 + $0x2b0] sm:$0xff]
        %v1734 = vld [vmem:[#allocation13 + $0x2b8] sm:$0xf]
        %v1735 = vld [vmem:[#allocation13 + $0x2bc] sm:$0xff]
        %v1736 = vld [vmem:[#allocation13 + $0x2c4] sm:$0xff]
        %v1737 = vld [vmem:[#allocation13 + $0x2cc] sm:$0xff]
        %v1738 = vld [vmem:[#allocation13 + $0x2d4] sm:$0xf]
        %v1739 = vld [vmem:[#allocation13 + $0x2d8] sm:$0xff]
        %v1740 = vld [vmem:[#allocation13 + $0x2e0] sm:$0xff]
        %v1741 = vld [vmem:[#allocation13 + $0x2e8] sm:$0xff]
        %v1742 = vld [vmem:[#allocation13 + $0x2f0] sm:$0xf]
        %v1743 = vld [vmem:[#allocation13 + $0x2f4] sm:$0xff]
        %v1744 = vld [vmem:[#allocation13 + $0x2fc] sm:$0xff]
        %v1745 = vld [vmem:[#allocation13 + $0x304] sm:$0xff]
        %v1746 = vld [vmem:[#allocation13 + $0x30c] sm:$0xf]
        %v1747 = vld [vmem:[#allocation13 + $0x310] sm:$0xff]
        %v1748 = vld [vmem:[#allocation13 + $0x318] sm:$0xff]
        %v1749 = vld [vmem:[#allocation13 + $0x320] sm:$0xff]
        %v1750 = vld [vmem:[#allocation13 + $0x328] sm:$0xf]
        %v1751 = vld [vmem:[#allocation13 + $0x32c] sm:$0xff]
        %v1752 = vld [vmem:[#allocation13 + $0x334] sm:$0xff]
        %v1753 = vld [vmem:[#allocation13 + $0x33c] sm:$0xff]
        %v1754 = vld [vmem:[#allocation13 + $0x344] sm:$0xf]
        %v1755 = vld [vmem:[#allocation13 + $0x348] sm:$0xff]
        %v1756 = vld [vmem:[#allocation13 + $0x350] sm:$0xff]
        %v1757 = vld [vmem:[#allocation13 + $0x358] sm:$0xff]
        %v1758 = vld [vmem:[#allocation13 + $0x360] sm:$0xf]
        %v1759 = vld [vmem:[#allocation13 + $0x364] sm:$0xff]
        %v1760 = vld [vmem:[#allocation13 + $0x36c] sm:$0xff]
        %v1761 = vld [vmem:[#allocation13 + $0x374] sm:$0xff]
        %v1762 = vld [vmem:[#allocation13 + $0x37c] sm:$0xf]
        %v1763 = vld [vmem:[#allocation14] sm:$0xff]
        %v1765 = vperm.slane %v1763, 0
        %v1766 = vperm.slane %v1763, 1
        %v1767 = vperm.slane %v1763, 2
        %v1768 = vperm.slane %v1763, 3
        %v1769 = vperm.slane %v1763, 4
        %v1770 = vperm.slane %v1763, 5
        %v1771 = vperm.slane %v1763, 6
        %v1907 = vunpack.c.l.b16 %v1635
        %v1908 = vunpack.c.h.b16 %v1635
        %v1909 = vunpack.c.l.b16 %v1636
        %v1910 = vunpack.c.h.b16 %v1636
        %v1911 = vunpack.c.l.b16 %v1637
        %v1912 = vunpack.c.h.b16 %v1637
        %v1913 = vunpack.c.l.b16 %v1638
        %v1914 = vunpack.c.l.b16 %v1639
        %v1915 = vunpack.c.h.b16 %v1639
        %v1916 = vunpack.c.l.b16 %v1640
        %v1917 = vunpack.c.h.b16 %v1640
        %v1918 = vunpack.c.l.b16 %v1641
        %v1919 = vunpack.c.h.b16 %v1641
        %v1920 = vunpack.c.l.b16 %v1642
        %v1921 = vunpack.c.l.b16 %v1643
        %v1922 = vunpack.c.h.b16 %v1643
        %v1923 = vunpack.c.l.b16 %v1644
        %v1924 = vunpack.c.h.b16 %v1644
        %v1925 = vunpack.c.l.b16 %v1645
        %v1926 = vunpack.c.h.b16 %v1645
        %v1927 = vunpack.c.l.b16 %v1646
        %v1928 = vunpack.c.l.b16 %v1647
        %v1929 = vunpack.c.h.b16 %v1647
        %v1930 = vunpack.c.l.b16 %v1648
        %v1931 = vunpack.c.h.b16 %v1648
        %v1932 = vunpack.c.l.b16 %v1649
        %v1933 = vunpack.c.h.b16 %v1649
        %v1934 = vunpack.c.l.b16 %v1650
        %v1935 = vunpack.c.l.b16 %v1651
        %v1936 = vunpack.c.h.b16 %v1651
        %v1937 = vunpack.c.l.b16 %v1652
        %v1938 = vunpack.c.h.b16 %v1652
        %v1939 = vunpack.c.l.b16 %v1653
        %v1940 = vunpack.c.h.b16 %v1653
        %v1941 = vunpack.c.l.b16 %v1654
        %v1942 = vunpack.c.l.b16 %v1655
        %v1943 = vunpack.c.h.b16 %v1655
        %v1944 = vunpack.c.l.b16 %v1656
        %v1945 = vunpack.c.h.b16 %v1656
        %v1946 = vunpack.c.l.b16 %v1657
        %v1947 = vunpack.c.h.b16 %v1657
        %v1948 = vunpack.c.l.b16 %v1658
        %v1949 = vunpack.c.l.b16 %v1659
        %v1950 = vunpack.c.h.b16 %v1659
        %v1951 = vunpack.c.l.b16 %v1660
        %v1952 = vunpack.c.h.b16 %v1660
        %v1953 = vunpack.c.l.b16 %v1661
        %v1954 = vunpack.c.h.b16 %v1661
        %v1955 = vunpack.c.l.b16 %v1662
        %v1956 = vunpack.c.l.b16 %v1663
        %v1957 = vunpack.c.h.b16 %v1663
        %v1958 = vunpack.c.l.b16 %v1664
        %v1959 = vunpack.c.h.b16 %v1664
        %v1960 = vunpack.c.l.b16 %v1665
        %v1961 = vunpack.c.h.b16 %v1665
        %v1962 = vunpack.c.l.b16 %v1666
        %v1963 = vunpack.c.l.b16 %v1667
        %v1964 = vunpack.c.h.b16 %v1667
        %v1965 = vunpack.c.l.b16 %v1668
        %v1966 = vunpack.c.h.b16 %v1668
        %v1967 = vunpack.c.l.b16 %v1669
        %v1968 = vunpack.c.h.b16 %v1669
        %v1969 = vunpack.c.l.b16 %v1670
        %v1970 = vunpack.c.l.b16 %v1671
        %v1971 = vunpack.c.h.b16 %v1671
        %v1972 = vunpack.c.l.b16 %v1672
        %v1973 = vunpack.c.h.b16 %v1672
        %v1974 = vunpack.c.l.b16 %v1673
        %v1975 = vunpack.c.h.b16 %v1673
        %v1976 = vunpack.c.l.b16 %v1674
        %v1977 = vunpack.c.l.b16 %v1675
        %v1978 = vunpack.c.h.b16 %v1675
        %v1979 = vunpack.c.l.b16 %v1676
        %v1980 = vunpack.c.h.b16 %v1676
        %v1981 = vunpack.c.l.b16 %v1677
        %v1982 = vunpack.c.h.b16 %v1677
        %v1983 = vunpack.c.l.b16 %v1678
        %v1984 = vunpack.c.l.b16 %v1679
        %v1985 = vunpack.c.h.b16 %v1679
        %v1986 = vunpack.c.l.b16 %v1680
        %v1987 = vunpack.c.h.b16 %v1680
        %v1988 = vunpack.c.l.b16 %v1681
        %v1989 = vunpack.c.h.b16 %v1681
        %v1990 = vunpack.c.l.b16 %v1682
        %v1991 = vunpack.c.l.b16 %v1683
        %v1992 = vunpack.c.h.b16 %v1683
        %v1993 = vunpack.c.l.b16 %v1684
        %v1994 = vunpack.c.h.b16 %v1684
        %v1995 = vunpack.c.l.b16 %v1685
        %v1996 = vunpack.c.h.b16 %v1685
        %v1997 = vunpack.c.l.b16 %v1686
        %v1998 = vunpack.c.l.b16 %v1687
        %v1999 = vunpack.c.h.b16 %v1687
        %v2000 = vunpack.c.l.b16 %v1688
        %v2001 = vunpack.c.h.b16 %v1688
        %v2002 = vunpack.c.l.b16 %v1689
        %v2003 = vunpack.c.h.b16 %v1689
        %v2004 = vunpack.c.l.b16 %v1690
        %v2005 = vunpack.c.l.b16 %v1691
        %v2006 = vunpack.c.h.b16 %v1691
        %v2007 = vunpack.c.l.b16 %v1692
        %v2008 = vunpack.c.h.b16 %v1692
        %v2009 = vunpack.c.l.b16 %v1693
        %v2010 = vunpack.c.h.b16 %v1693
        %v2011 = vunpack.c.l.b16 %v1694
        %v2012 = vunpack.c.l.b16 %v1695
        %v2013 = vunpack.c.h.b16 %v1695
        %v2014 = vunpack.c.l.b16 %v1696
        %v2015 = vunpack.c.h.b16 %v1696
        %v2016 = vunpack.c.l.b16 %v1697
        %v2017 = vunpack.c.h.b16 %v1697
        %v2018 = vunpack.c.l.b16 %v1698
        %v2019 = vunpack.c.l.b16 %v1699
        %v2020 = vunpack.c.h.b16 %v1699
        %v2021 = vunpack.c.l.b16 %v1700
        %v2022 = vunpack.c.h.b16 %v1700
        %v2023 = vunpack.c.l.b16 %v1701
        %v2024 = vunpack.c.h.b16 %v1701
        %v2025 = vunpack.c.l.b16 %v1702
        %v2026 = vunpack.c.l.b16 %v1703
        %v2027 = vunpack.c.h.b16 %v1703
        %v2028 = vunpack.c.l.b16 %v1704
        %v2029 = vunpack.c.h.b16 %v1704
        %v2030 = vunpack.c.l.b16 %v1705
        %v2031 = vunpack.c.h.b16 %v1705
        %v2032 = vunpack.c.l.b16 %v1706
        %v2033 = vunpack.c.l.b16 %v1707
        %v2034 = vunpack.c.h.b16 %v1707
        %v2035 = vunpack.c.l.b16 %v1708
        %v2036 = vunpack.c.h.b16 %v1708
        %v2037 = vunpack.c.l.b16 %v1709
        %v2038 = vunpack.c.h.b16 %v1709
        %v2039 = vunpack.c.l.b16 %v1710
        %v2040 = vunpack.c.l.b16 %v1711
        %v2041 = vunpack.c.h.b16 %v1711
        %v2042 = vunpack.c.l.b16 %v1712
        %v2043 = vunpack.c.h.b16 %v1712
        %v2044 = vunpack.c.l.b16 %v1713
        %v2045 = vunpack.c.h.b16 %v1713
        %v2046 = vunpack.c.l.b16 %v1714
        %v2047 = vunpack.c.l.b16 %v1715
        %v2048 = vunpack.c.h.b16 %v1715
        %v2049 = vunpack.c.l.b16 %v1716
        %v2050 = vunpack.c.h.b16 %v1716
        %v2051 = vunpack.c.l.b16 %v1717
        %v2052 = vunpack.c.h.b16 %v1717
        %v2053 = vunpack.c.l.b16 %v1718
        %v2054 = vunpack.c.l.b16 %v1719
        %v2055 = vunpack.c.h.b16 %v1719
        %v2056 = vunpack.c.l.b16 %v1720
        %v2057 = vunpack.c.h.b16 %v1720
        %v2058 = vunpack.c.l.b16 %v1721
        %v2059 = vunpack.c.h.b16 %v1721
        %v2060 = vunpack.c.l.b16 %v1722
        %v2061 = vunpack.c.l.b16 %v1723
        %v2062 = vunpack.c.h.b16 %v1723
        %v2063 = vunpack.c.l.b16 %v1724
        %v2064 = vunpack.c.h.b16 %v1724
        %v2065 = vunpack.c.l.b16 %v1725
        %v2066 = vunpack.c.h.b16 %v1725
        %v2067 = vunpack.c.l.b16 %v1726
        %v2068 = vunpack.c.l.b16 %v1727
        %v2069 = vunpack.c.h.b16 %v1727
        %v2070 = vunpack.c.l.b16 %v1728
        %v2071 = vunpack.c.h.b16 %v1728
        %v2072 = vunpack.c.l.b16 %v1729
        %v2073 = vunpack.c.h.b16 %v1729
        %v2074 = vunpack.c.l.b16 %v1730
        %v2075 = vunpack.c.l.b16 %v1731
        %v2076 = vunpack.c.h.b16 %v1731
        %v2077 = vunpack.c.l.b16 %v1732
        %v2078 = vunpack.c.h.b16 %v1732
        %v2079 = vunpack.c.l.b16 %v1733
        %v2080 = vunpack.c.h.b16 %v1733
        %v2081 = vunpack.c.l.b16 %v1734
        %v2082 = vunpack.c.l.b16 %v1735
        %v2083 = vunpack.c.h.b16 %v1735
        %v2084 = vunpack.c.l.b16 %v1736
        %v2085 = vunpack.c.h.b16 %v1736
        %v2086 = vunpack.c.l.b16 %v1737
        %v2087 = vunpack.c.h.b16 %v1737
        %v2088 = vunpack.c.l.b16 %v1738
        %v2089 = vunpack.c.l.b16 %v1739
        %v2090 = vunpack.c.h.b16 %v1739
        %v2091 = vunpack.c.l.b16 %v1740
        %v2092 = vunpack.c.h.b16 %v1740
        %v2093 = vunpack.c.l.b16 %v1741
        %v2094 = vunpack.c.h.b16 %v1741
        %v2095 = vunpack.c.l.b16 %v1742
        %v2096 = vunpack.c.l.b16 %v1743
        %v2097 = vunpack.c.h.b16 %v1743
        %v2098 = vunpack.c.l.b16 %v1744
        %v2099 = vunpack.c.h.b16 %v1744
        %v2100 = vunpack.c.l.b16 %v1745
        %v2101 = vunpack.c.h.b16 %v1745
        %v2102 = vunpack.c.l.b16 %v1746
        %v2103 = vunpack.c.l.b16 %v1747
        %v2104 = vunpack.c.h.b16 %v1747
        %v2105 = vunpack.c.l.b16 %v1748
        %v2106 = vunpack.c.h.b16 %v1748
        %v2107 = vunpack.c.l.b16 %v1749
        %v2108 = vunpack.c.h.b16 %v1749
        %v2109 = vunpack.c.l.b16 %v1750
        %v2110 = vunpack.c.l.b16 %v1751
        %v2111 = vunpack.c.h.b16 %v1751
        %v2112 = vunpack.c.l.b16 %v1752
        %v2113 = vunpack.c.h.b16 %v1752
        %v2114 = vunpack.c.l.b16 %v1753
        %v2115 = vunpack.c.h.b16 %v1753
        %v2116 = vunpack.c.l.b16 %v1754
        %v2117 = vunpack.c.l.b16 %v1755
        %v2118 = vunpack.c.h.b16 %v1755
        %v2119 = vunpack.c.l.b16 %v1756
        %v2120 = vunpack.c.h.b16 %v1756
        %v2121 = vunpack.c.l.b16 %v1757
        %v2122 = vunpack.c.h.b16 %v1757
        %v2123 = vunpack.c.l.b16 %v1758
        %v2124 = vunpack.c.l.b16 %v1759
        %v2125 = vunpack.c.h.b16 %v1759
        %v2126 = vunpack.c.l.b16 %v1760
        %v2127 = vunpack.c.h.b16 %v1760
        %v2128 = vunpack.c.l.b16 %v1761
        %v2129 = vunpack.c.h.b16 %v1761
        %v2130 = vunpack.c.l.b16 %v1762
        %v2131 = vpack.c.b16 %v1914, %v1907
        %v2132 = vpack.c.b16 %v1915, %v1908
        %v2133 = vpack.c.b16 %v1916, %v1909
        %v2134 = vpack.c.b16 %v1917, %v1910
        %v2135 = vpack.c.b16 %v1918, %v1911
        %v2136 = vpack.c.b16 %v1919, %v1912
        %v2137 = vpack.c.b16 %v1920, %v1913
        %v2138 = vpack.c.b16 %v1928, %v1921
        %v2139 = vpack.c.b16 %v1929, %v1922
        %v2140 = vpack.c.b16 %v1930, %v1923
        %v2141 = vpack.c.b16 %v1931, %v1924
        %v2142 = vpack.c.b16 %v1932, %v1925
        %v2143 = vpack.c.b16 %v1933, %v1926
        %v2144 = vpack.c.b16 %v1934, %v1927
        %v2145 = vpack.c.b16 %v1942, %v1935
        %v2146 = vpack.c.b16 %v1943, %v1936
        %v2147 = vpack.c.b16 %v1944, %v1937
        %v2148 = vpack.c.b16 %v1945, %v1938
        %v2149 = vpack.c.b16 %v1946, %v1939
        %v2150 = vpack.c.b16 %v1947, %v1940
        %v2151 = vpack.c.b16 %v1948, %v1941
        %v2152 = vpack.c.b16 %v1956, %v1949
        %v2153 = vpack.c.b16 %v1957, %v1950
        %v2154 = vpack.c.b16 %v1958, %v1951
        %v2155 = vpack.c.b16 %v1959, %v1952
        %v2156 = vpack.c.b16 %v1960, %v1953
        %v2157 = vpack.c.b16 %v1961, %v1954
        %v2158 = vpack.c.b16 %v1962, %v1955
        %v2159 = vpack.c.b16 %v1970, %v1963
        %v2160 = vpack.c.b16 %v1971, %v1964
        %v2161 = vpack.c.b16 %v1972, %v1965
        %v2162 = vpack.c.b16 %v1973, %v1966
        %v2163 = vpack.c.b16 %v1974, %v1967
        %v2164 = vpack.c.b16 %v1975, %v1968
        %v2165 = vpack.c.b16 %v1976, %v1969
        %v2166 = vpack.c.b16 %v1984, %v1977
        %v2167 = vpack.c.b16 %v1985, %v1978
        %v2168 = vpack.c.b16 %v1986, %v1979
        %v2169 = vpack.c.b16 %v1987, %v1980
        %v2170 = vpack.c.b16 %v1988, %v1981
        %v2171 = vpack.c.b16 %v1989, %v1982
        %v2172 = vpack.c.b16 %v1990, %v1983
        %v2173 = vpack.c.b16 %v1998, %v1991
        %v2174 = vpack.c.b16 %v1999, %v1992
        %v2175 = vpack.c.b16 %v2000, %v1993
        %v2176 = vpack.c.b16 %v2001, %v1994
        %v2177 = vpack.c.b16 %v2002, %v1995
        %v2178 = vpack.c.b16 %v2003, %v1996
        %v2179 = vpack.c.b16 %v2004, %v1997
        %v2180 = vpack.c.b16 %v2012, %v2005
        %v2181 = vpack.c.b16 %v2013, %v2006
        %v2182 = vpack.c.b16 %v2014, %v2007
        %v2183 = vpack.c.b16 %v2015, %v2008
        %v2184 = vpack.c.b16 %v2016, %v2009
        %v2185 = vpack.c.b16 %v2017, %v2010
        %v2186 = vpack.c.b16 %v2018, %v2011
        %v2187 = vpack.c.b16 %v2026, %v2019
        %v2188 = vpack.c.b16 %v2027, %v2020
        %v2189 = vpack.c.b16 %v2028, %v2021
        %v2190 = vpack.c.b16 %v2029, %v2022
        %v2191 = vpack.c.b16 %v2030, %v2023
        %v2192 = vpack.c.b16 %v2031, %v2024
        %v2193 = vpack.c.b16 %v2032, %v2025
        %v2194 = vpack.c.b16 %v2040, %v2033
        %v2195 = vpack.c.b16 %v2041, %v2034
        %v2196 = vpack.c.b16 %v2042, %v2035
        %v2197 = vpack.c.b16 %v2043, %v2036
        %v2198 = vpack.c.b16 %v2044, %v2037
        %v2199 = vpack.c.b16 %v2045, %v2038
        %v2200 = vpack.c.b16 %v2046, %v2039
        %v2201 = vpack.c.b16 %v2054, %v2047
        %v2202 = vpack.c.b16 %v2055, %v2048
        %v2203 = vpack.c.b16 %v2056, %v2049
        %v2204 = vpack.c.b16 %v2057, %v2050
        %v2205 = vpack.c.b16 %v2058, %v2051
        %v2206 = vpack.c.b16 %v2059, %v2052
        %v2207 = vpack.c.b16 %v2060, %v2053
        %v2208 = vpack.c.b16 %v2068, %v2061
        %v2209 = vpack.c.b16 %v2069, %v2062
        %v2210 = vpack.c.b16 %v2070, %v2063
        %v2211 = vpack.c.b16 %v2071, %v2064
        %v2212 = vpack.c.b16 %v2072, %v2065
        %v2213 = vpack.c.b16 %v2073, %v2066
        %v2214 = vpack.c.b16 %v2074, %v2067
        %v2215 = vpack.c.b16 %v2082, %v2075
        %v2216 = vpack.c.b16 %v2083, %v2076
        %v2217 = vpack.c.b16 %v2084, %v2077
        %v2218 = vpack.c.b16 %v2085, %v2078
        %v2219 = vpack.c.b16 %v2086, %v2079
        %v2220 = vpack.c.b16 %v2087, %v2080
        %v2221 = vpack.c.b16 %v2088, %v2081
        %v2222 = vpack.c.b16 %v2096, %v2089
        %v2223 = vpack.c.b16 %v2097, %v2090
        %v2224 = vpack.c.b16 %v2098, %v2091
        %v2225 = vpack.c.b16 %v2099, %v2092
        %v2226 = vpack.c.b16 %v2100, %v2093
        %v2227 = vpack.c.b16 %v2101, %v2094
        %v2228 = vpack.c.b16 %v2102, %v2095
        %v2229 = vpack.c.b16 %v2110, %v2103
        %v2230 = vpack.c.b16 %v2111, %v2104
        %v2231 = vpack.c.b16 %v2112, %v2105
        %v2232 = vpack.c.b16 %v2113, %v2106
        %v2233 = vpack.c.b16 %v2114, %v2107
        %v2234 = vpack.c.b16 %v2115, %v2108
        %v2235 = vpack.c.b16 %v2116, %v2109
        %v2236 = vpack.c.b16 %v2124, %v2117
        %v2237 = vpack.c.b16 %v2125, %v2118
        %v2238 = vpack.c.b16 %v2126, %v2119
        %v2239 = vpack.c.b16 %v2127, %v2120
        %v2240 = vpack.c.b16 %v2128, %v2121
        %v2241 = vpack.c.b16 %v2129, %v2122
        %v2242 = vpack.c.b16 %v2130, %v2123
        %2355 = vmatpush.bf16.msra.mxu0 %v2180
        %2356 = vmatpush.bf16.msra.mxu0 %v2173
        %2357 = vmatpush.bf16.msra.mxu0 %v2166
        %2358 = vmatpush.bf16.msra.mxu0 %v2159
        %2359 = vmatpush.bf16.msra.mxu0 %v2152
        %2360 = vmatpush.bf16.msra.mxu0 %v2145
        %2361 = vmatpush.bf16.msra.mxu0 %v2138
        %2362 = vmatpush.bf16.msra.mxu0 %v2131
        %2363 = vmatmul.bf16.gmra.mxu0 %v1633
        %v2364 = vpop.f32.mrf.mxu0
        %v2365 = vadd.f32 %v1765, %v2364
        %v2366 = vpop.f32.mrf.mxu0
        %v2367 = vadd.f32 %v1765, %v2366
        %2368 = vdwg.mxu0
        %2369 = vmatpush.bf16.msra.mxu0 %v2236
        %2370 = vmatpush.bf16.msra.mxu0 %v2229
        %2371 = vmatpush.bf16.msra.mxu0 %v2222
        %2372 = vmatpush.bf16.msra.mxu0 %v2215
        %2373 = vmatpush.bf16.msra.mxu0 %v2208
        %2374 = vmatpush.bf16.msra.mxu0 %v2201
        %2375 = vmatpush.bf16.msra.mxu0 %v2194
        %2376 = vmatpush.bf16.msra.mxu0 %v2187
        %2377 = vmatmul.bf16.gmra.mxu0 %v1634
        %v2378 = vpop.f32.mrf.mxu0
        %v2379 = vadd.f32 %v2365, %v2378
        %v2380 = vpop.f32.mrf.mxu0
        %v2381 = vadd.f32 %v2367, %v2380
        %2382 = vdwg.mxu0
        %2383 = vmatpush.bf16.msra.mxu0 %v2181
        %2384 = vmatpush.bf16.msra.mxu0 %v2174
        %2385 = vmatpush.bf16.msra.mxu0 %v2167
        %2386 = vmatpush.bf16.msra.mxu0 %v2160
        %2387 = vmatpush.bf16.msra.mxu0 %v2153
        %2388 = vmatpush.bf16.msra.mxu0 %v2146
        %2389 = vmatpush.bf16.msra.mxu0 %v2139
        %2390 = vmatpush.bf16.msra.mxu0 %v2132
        %2391 = vmatmul.bf16.gmra.mxu0 %v1633
        %v2392 = vpop.f32.mrf.mxu0
        %v2393 = vadd.f32 %v1766, %v2392
        %v2394 = vpop.f32.mrf.mxu0
        %v2395 = vadd.f32 %v1766, %v2394
        %2396 = vdwg.mxu0
        %2397 = vmatpush.bf16.msra.mxu0 %v2237
        %2398 = vmatpush.bf16.msra.mxu0 %v2230
        %2399 = vmatpush.bf16.msra.mxu0 %v2223
        %2400 = vmatpush.bf16.msra.mxu0 %v2216
        %2401 = vmatpush.bf16.msra.mxu0 %v2209
        %2402 = vmatpush.bf16.msra.mxu0 %v2202
        %2403 = vmatpush.bf16.msra.mxu0 %v2195
        %2404 = vmatpush.bf16.msra.mxu0 %v2188
        %2405 = vmatmul.bf16.gmra.mxu0 %v1634
        %v2406 = vpop.f32.mrf.mxu0
        %v2407 = vadd.f32 %v2393, %v2406
        %v2408 = vpop.f32.mrf.mxu0
        %v2409 = vadd.f32 %v2395, %v2408
        %2410 = vdwg.mxu0
        %2411 = vmatpush.bf16.msra.mxu0 %v2182
        %2412 = vmatpush.bf16.msra.mxu0 %v2175
        %2413 = vmatpush.bf16.msra.mxu0 %v2168
        %2414 = vmatpush.bf16.msra.mxu0 %v2161
        %2415 = vmatpush.bf16.msra.mxu0 %v2154
        %2416 = vmatpush.bf16.msra.mxu0 %v2147
        %2417 = vmatpush.bf16.msra.mxu0 %v2140
        %2418 = vmatpush.bf16.msra.mxu0 %v2133
        %2419 = vmatmul.bf16.gmra.mxu0 %v1633
        %v2420 = vpop.f32.mrf.mxu0
        %v2421 = vadd.f32 %v1767, %v2420
        %v2422 = vpop.f32.mrf.mxu0
        %v2423 = vadd.f32 %v1767, %v2422
        %2424 = vdwg.mxu0
        %2425 = vmatpush.bf16.msra.mxu0 %v2238
        %2426 = vmatpush.bf16.msra.mxu0 %v2231
        %2427 = vmatpush.bf16.msra.mxu0 %v2224
        %2428 = vmatpush.bf16.msra.mxu0 %v2217
        %2429 = vmatpush.bf16.msra.mxu0 %v2210
        %2430 = vmatpush.bf16.msra.mxu0 %v2203
        %2431 = vmatpush.bf16.msra.mxu0 %v2196
        %2432 = vmatpush.bf16.msra.mxu0 %v2189
        %2433 = vmatmul.bf16.gmra.mxu0 %v1634
        %v2434 = vpop.f32.mrf.mxu0
        %v2435 = vadd.f32 %v2421, %v2434
        %v2436 = vpop.f32.mrf.mxu0
        %v2437 = vadd.f32 %v2423, %v2436
        %2438 = vdwg.mxu0
        %2439 = vmatpush.bf16.msra.mxu0 %v2183
        %2440 = vmatpush.bf16.msra.mxu0 %v2176
        %2441 = vmatpush.bf16.msra.mxu0 %v2169
        %2442 = vmatpush.bf16.msra.mxu0 %v2162
        %2443 = vmatpush.bf16.msra.mxu0 %v2155
        %2444 = vmatpush.bf16.msra.mxu0 %v2148
        %2445 = vmatpush.bf16.msra.mxu0 %v2141
        %2446 = vmatpush.bf16.msra.mxu0 %v2134
        %2447 = vmatmul.bf16.gmra.mxu0 %v1633
        %v2448 = vpop.f32.mrf.mxu0
        %v2449 = vadd.f32 %v1768, %v2448
        %v2450 = vpop.f32.mrf.mxu0
        %v2451 = vadd.f32 %v1768, %v2450
        %2452 = vdwg.mxu0
        %2453 = vmatpush.bf16.msra.mxu0 %v2239
        %2454 = vmatpush.bf16.msra.mxu0 %v2232
        %2455 = vmatpush.bf16.msra.mxu0 %v2225
        %2456 = vmatpush.bf16.msra.mxu0 %v2218
        %2457 = vmatpush.bf16.msra.mxu0 %v2211
        %2458 = vmatpush.bf16.msra.mxu0 %v2204
        %2459 = vmatpush.bf16.msra.mxu0 %v2197
        %2460 = vmatpush.bf16.msra.mxu0 %v2190
        %2461 = vmatmul.bf16.gmra.mxu0 %v1634
        %v2462 = vpop.f32.mrf.mxu0
        %v2463 = vadd.f32 %v2449, %v2462
        %v2464 = vpop.f32.mrf.mxu0
        %v2465 = vadd.f32 %v2451, %v2464
        %2466 = vdwg.mxu0
        %2467 = vmatpush.bf16.msra.mxu0 %v2184
        %2468 = vmatpush.bf16.msra.mxu0 %v2177
        %2469 = vmatpush.bf16.msra.mxu0 %v2170
        %2470 = vmatpush.bf16.msra.mxu0 %v2163
        %2471 = vmatpush.bf16.msra.mxu0 %v2156
        %2472 = vmatpush.bf16.msra.mxu0 %v2149
        %2473 = vmatpush.bf16.msra.mxu0 %v2142
        %2474 = vmatpush.bf16.msra.mxu0 %v2135
        %2475 = vmatmul.bf16.gmra.mxu0 %v1633
        %v2476 = vpop.f32.mrf.mxu0
        %v2477 = vadd.f32 %v1769, %v2476
        %v2478 = vpop.f32.mrf.mxu0
        %v2479 = vadd.f32 %v1769, %v2478
        %2480 = vdwg.mxu0
        %2481 = vmatpush.bf16.msra.mxu0 %v2240
        %2482 = vmatpush.bf16.msra.mxu0 %v2233
        %2483 = vmatpush.bf16.msra.mxu0 %v2226
        %2484 = vmatpush.bf16.msra.mxu0 %v2219
        %2485 = vmatpush.bf16.msra.mxu0 %v2212
        %2486 = vmatpush.bf16.msra.mxu0 %v2205
        %2487 = vmatpush.bf16.msra.mxu0 %v2198
        %2488 = vmatpush.bf16.msra.mxu0 %v2191
        %2489 = vmatmul.bf16.gmra.mxu0 %v1634
        %v2490 = vpop.f32.mrf.mxu0
        %v2491 = vadd.f32 %v2477, %v2490
        %v2492 = vpop.f32.mrf.mxu0
        %v2493 = vadd.f32 %v2479, %v2492
        %2494 = vdwg.mxu0
        %2495 = vmatpush.bf16.msra.mxu0 %v2185
        %2496 = vmatpush.bf16.msra.mxu0 %v2178
        %2497 = vmatpush.bf16.msra.mxu0 %v2171
        %2498 = vmatpush.bf16.msra.mxu0 %v2164
        %2499 = vmatpush.bf16.msra.mxu0 %v2157
        %2500 = vmatpush.bf16.msra.mxu0 %v2150
        %2501 = vmatpush.bf16.msra.mxu0 %v2143
        %2502 = vmatpush.bf16.msra.mxu0 %v2136
        %2503 = vmatmul.bf16.gmra.mxu0 %v1633
        %v2504 = vpop.f32.mrf.mxu0
        %v2505 = vadd.f32 %v1770, %v2504
        %v2506 = vpop.f32.mrf.mxu0
        %v2507 = vadd.f32 %v1770, %v2506
        %2508 = vdwg.mxu0
        %2509 = vmatpush.bf16.msra.mxu0 %v2241
        %2510 = vmatpush.bf16.msra.mxu0 %v2234
        %2511 = vmatpush.bf16.msra.mxu0 %v2227
        %2512 = vmatpush.bf16.msra.mxu0 %v2220
        %2513 = vmatpush.bf16.msra.mxu0 %v2213
        %2514 = vmatpush.bf16.msra.mxu0 %v2206
        %2515 = vmatpush.bf16.msra.mxu0 %v2199
        %2516 = vmatpush.bf16.msra.mxu0 %v2192
        %2517 = vmatmul.bf16.gmra.mxu0 %v1634
        %v2518 = vpop.f32.mrf.mxu0
        %v2519 = vadd.f32 %v2505, %v2518
        %v2520 = vpop.f32.mrf.mxu0
        %v2521 = vadd.f32 %v2507, %v2520
        %2522 = vdwg.mxu0
        %2523 = vmatpush.bf16.msra.mxu0 %v2186
        %2524 = vmatpush.bf16.msra.mxu0 %v2179
        %2525 = vmatpush.bf16.msra.mxu0 %v2172
        %2526 = vmatpush.bf16.msra.mxu0 %v2165
        %2527 = vmatpush.bf16.msra.mxu0 %v2158
        %2528 = vmatpush.bf16.msra.mxu0 %v2151
        %2529 = vmatpush.bf16.msra.mxu0 %v2144
        %2530 = vmatpush.bf16.msra.mxu0 %v2137
        %2531 = vmatmul.bf16.gmra.mxu0 %v1633
        %v2532 = vpop.f32.mrf.mxu0
        %v2533 = vadd.f32 %v1771, %v2532
        %v2534 = vpop.f32.mrf.mxu0
        %v2535 = vadd.f32 %v1771, %v2534
        %2536 = vdwg.mxu0
        %2537 = vmatpush.bf16.msra.mxu0 %v2242
        %2538 = vmatpush.bf16.msra.mxu0 %v2235
        %2539 = vmatpush.bf16.msra.mxu0 %v2228
        %2540 = vmatpush.bf16.msra.mxu0 %v2221
        %2541 = vmatpush.bf16.msra.mxu0 %v2214
        %2542 = vmatpush.bf16.msra.mxu0 %v2207
        %2543 = vmatpush.bf16.msra.mxu0 %v2200
        %2544 = vmatpush.bf16.msra.mxu0 %v2193
        %2545 = vmatmul.bf16.gmra.mxu0 %v1634
        %v2546 = vpop.f32.mrf.mxu0
        %v2547 = vadd.f32 %v2533, %v2546
        %v2548 = vpop.f32.mrf.mxu0
        %v2549 = vadd.f32 %v2535, %v2548
        %2550 = vdwg.mxu0
        %v2551 = vsub.f32 0.0, %v2379
        %v2552 = vsub.f32 0.0, %v2407
        %v2553 = vsub.f32 0.0, %v2435
        %v2554 = vsub.f32 0.0, %v2463
        %v2555 = vsub.f32 0.0, %v2491
        %v2556 = vsub.f32 0.0, %v2519
        %v2557 = vsub.f32 0.0, %v2547
        %v2558 = vsub.f32 0.0, %v2381
        %v2559 = vsub.f32 0.0, %v2409
        %v2560 = vsub.f32 0.0, %v2437
        %v2561 = vsub.f32 0.0, %v2465
        %v2562 = vsub.f32 0.0, %v2493
        %v2563 = vsub.f32 0.0, %v2521
        %v2564 = vsub.f32 0.0, %v2549
        %v2565 = vmul.f32 %v2551, 1.442695
        %v2566 = vpow.pop %v2565
        %v2567 = vmul.f32 %v2552, 1.442695
        %v2568 = vpow.pop %v2567
        %v2569 = vmul.f32 %v2553, 1.442695
        %v2570 = vpow.pop %v2569
        %v2571 = vmul.f32 %v2554, 1.442695
        %v2572 = vpow.pop %v2571
        %v2573 = vmul.f32 %v2555, 1.442695
        %v2574 = vpow.pop %v2573
        %v2575 = vmul.f32 %v2556, 1.442695
        %v2576 = vpow.pop %v2575
        %v2577 = vmul.f32 %v2557, 1.442695
        %v2578 = vpow.pop %v2577
        %v2579 = vmul.f32 %v2558, 1.442695
        %v2580 = vpow.pop %v2579
        %v2581 = vmul.f32 %v2559, 1.442695
        %v2582 = vpow.pop %v2581
        %v2583 = vmul.f32 %v2560, 1.442695
        %v2584 = vpow.pop %v2583
        %v2585 = vmul.f32 %v2561, 1.442695
        %v2586 = vpow.pop %v2585
        %v2587 = vmul.f32 %v2562, 1.442695
        %v2588 = vpow.pop %v2587
        %v2589 = vmul.f32 %v2563, 1.442695
        %v2590 = vpow.pop %v2589
        %v2591 = vmul.f32 %v2564, 1.442695
        %v2592 = vpow.pop %v2591
        %v2593 = vadd.f32 %v2566, 1.0
        %v2594 = vadd.f32 %v2568, 1.0
        %v2595 = vadd.f32 %v2570, 1.0
        %v2596 = vadd.f32 %v2572, 1.0
        %v2597 = vadd.f32 %v2574, 1.0
        %v2598 = vadd.f32 %v2576, 1.0
        %v2599 = vadd.f32 %v2578, 1.0
        %v2600 = vadd.f32 %v2580, 1.0
        %v2601 = vadd.f32 %v2582, 1.0
        %v2602 = vadd.f32 %v2584, 1.0
        %v2603 = vadd.f32 %v2586, 1.0
        %v2604 = vadd.f32 %v2588, 1.0
        %v2605 = vadd.f32 %v2590, 1.0
        %v2606 = vadd.f32 %v2592, 1.0
        %v2607 = vrcp.pop %v2593
        %v2608 = vrcp.pop %v2594
        %v2609 = vrcp.pop %v2595
        %v2610 = vrcp.pop %v2596
        %v2611 = vrcp.pop %v2597
        %v2612 = vrcp.pop %v2598
        %v2613 = vrcp.pop %v2599
        %v2614 = vrcp.pop %v2600
        %v2615 = vrcp.pop %v2601
        %v2616 = vrcp.pop %v2602
        %v2617 = vrcp.pop %v2603
        %v2618 = vrcp.pop %v2604
        %v2619 = vrcp.pop %v2605
        %v2620 = vrcp.pop %v2606
        %v2621 = vpack.c.bf16 %v2608, %v2607
        %v2622 = vpack.c.bf16 %v2610, %v2609
        %v2623 = vpack.c.bf16 %v2612, %v2611
        %v2624 = vpack.c.bf16 %v2613, %v2613
        %v2625 = vpack.c.bf16 %v2615, %v2614
        %v2626 = vpack.c.bf16 %v2617, %v2616
        %v2627 = vpack.c.bf16 %v2619, %v2618
        %v2628 = vpack.c.bf16 %v2620, %v2620
        %2629 = vst [vmem:[%s501] sm:$0xff] %v2621
        %2630 = vst [vmem:[%s501 + $0x8] sm:$0xff] %v2622
        %2631 = vst [vmem:[%s501 + $0x10] sm:$0xff] %v2623
        %2632 = vst [vmem:[%s501 + $0x18] sm:$0xf] %v2624
        %2633 = vst [vmem:[%s501 + $0x1c] sm:$0xff] %v2625
        %2634 = vst [vmem:[%s501 + $0x24] sm:$0xff] %v2626
        %2635 = vst [vmem:[%s501 + $0x2c] sm:$0xff] %v2627
        %2636 = vst [vmem:[%s501 + $0x34] sm:$0xf] %v2628
        %s2637 = sand.u32 %s237, 1
        %s2638 = scalar_lea.sflag [#allocation4], %s2637
        %s2639 = sand.u32 %s237, 1
        %s2640 = smul.addr %s2639, 8
        %s2641 = scalar_lea.vmem [#allocation16], %s2640
        %s2642 = sand.u32 %s263, 1
        %s2643 = scalar_lea.sflag [#allocation18], %s2642
        %s2644 = sand.u32 %s263, 1
        %s2645 = smul.addr %s2644, 56
        %s2646 = scalar_lea.vmem [#allocation17], %s2645
        // Predicated region
        $region89: #{autoencoder_forward_padded.1} parent=55 // pred_check
          %p2647 = pneg %p247
        $region90: #{autoencoder_forward_padded.1} parent=55 // pred_check_branch
          %2649 = sbr.rel (%p2647) target = $region92
        $region91: #{autoencoder_forward_padded.1} parent=55 // pred_region
          %s2650 = smul.u32 2, %s35
          %2652 = vsyncadd %s2638, 0
          %s2653 = smul.addr %s2650, 4
          %s2654 = scalar_lea.hbm %s9, %s2653
          %s2655 = sshll.u32 %s2641, 4
          %s2656 = int_to_ptr.vmem [resolvable:$true] %s2655
          %s2657 = sshll.u32 %s2654, 4
          %s2658 = int_to_ptr.hbm [resolvable:$true] %s2657
          %2663 = dma.vmem_to_hbm [thread:$0]  %s2656, 128, %s2658, %s2638, 64, 64, 4
        $region92: #{autoencoder_forward_padded.1} parent=55 // pred_fallthru
          _
        // Predicated region
        $region93: #{autoencoder_forward_padded.1} parent=55 // pred_check
          %p2664 = pneg %p273
        $region94: #{autoencoder_forward_padded.1} parent=55 // pred_check_branch
          %2666 = sbr.rel (%p2664) target = $region96
        $region95: #{autoencoder_forward_padded.1} parent=55 // pred_region
          %s2667 = smul.u32 2, %s35
          %2669 = vsyncadd %s2643, 0
          %s2670 = smul.addr %s2667, 7
          %s2671 = smul.addr %s2670, 4
          %s2672 = scalar_lea.hbm %s10, %s2671
          %s2673 = sshll.u32 %s2646, 4
          %s2674 = int_to_ptr.vmem [resolvable:$true] %s2673
          %s2675 = sshll.u32 %s2672, 4
          %s2676 = int_to_ptr.hbm [resolvable:$true] %s2675
          %2681 = dma.vmem_to_hbm [thread:$0]  %s2674, 896, %s2676, %s2643, 448, 448, 28
        $region96: #{autoencoder_forward_padded.1} parent=55 // pred_fallthru
          _
      $region56: #{autoencoder_forward_padded.1} parent=5 // pred_fallthru
        _
      %p2682 = scmp.le.s32.totalorder 2, %s30
      // Predicated region
      $region97: #{autoencoder_forward_padded.1} parent=5 // pred_check
        %p2683 = pneg %p2682
      $region98: #{autoencoder_forward_padded.1} parent=5 // pred_check_branch
        %2685 = sbr.rel (%p2683) target = $region100
      $region99: #{autoencoder_forward_padded.1} parent=5 // pred_region
        %s2686 = ssub.s32 %s30, 2
        // Predicated region
        $region101: #{autoencoder_forward_padded.1} parent=99 // pred_check
          %p2687 = pneg %p253
        $region102: #{autoencoder_forward_padded.1} parent=99 // pred_check_branch
          %2689 = sbr.rel (%p2687) target = $region104
        $region103: #{autoencoder_forward_padded.1} parent=99 // pred_region
          %s2690 = sand.u32 %s238, 1
          %s2691 = scalar_lea.sflag [#allocation4], %s2690
          %s2692 = sand.u32 %s238, 1
          %s2693 = smul.addr %s2692, 8
          %s2694 = scalar_lea.vmem [#allocation16], %s2693
          %2696 = dma.done %s2691, 128
        $region104: #{autoencoder_forward_padded.1} parent=99 // pred_fallthru
          _
        // Predicated region
        $region105: #{autoencoder_forward_padded.1} parent=99 // pred_check
          %p2697 = pneg %p279
        $region106: #{autoencoder_forward_padded.1} parent=99 // pred_check_branch
          %2699 = sbr.rel (%p2697) target = $region108
        $region107: #{autoencoder_forward_padded.1} parent=99 // pred_region
          %s2700 = sand.u32 %s264, 1
          %s2701 = scalar_lea.sflag [#allocation18], %s2700
          %s2702 = sand.u32 %s264, 1
          %s2703 = smul.addr %s2702, 56
          %s2704 = scalar_lea.vmem [#allocation17], %s2703
          %2706 = dma.done %s2701, 896
        $region108: #{autoencoder_forward_padded.1} parent=99 // pred_fallthru
          _
      $region100: #{autoencoder_forward_padded.1} parent=5 // pred_fallthru
        _
    $region6: #{autoencoder_forward_padded.1} parent=1 // loop_footer
      %s34 = sadd.s32 1, %s30
    $region7: #{autoencoder_forward_padded.1} parent=1 // loop_footer_branch
      %29 = sbr.rel target = $region3
    $region8: #{autoencoder_forward_padded.1} parent=1 // loop_exit
      _
    %2707 = vsyncpa [#allocation3], 1
    %s2708 = scalar_lea.sflag [#allocation3], 1
    %2709 = vsyncpa %s2708, 1
    %2710 = vsyncpa [#allocation6], 1
    %2711 = vsyncpa [#allocation9], 1
    %2712 = vsyncpa [#allocation12], 1
    %2713 = vsyncpa [#allocation15], 1
    %2714 = vsyncpa [#allocation4], 1
    %s2715 = scalar_lea.sflag [#allocation4], 1
    %2716 = vsyncpa %s2715, 1
    %2717 = vsyncpa [#allocation18], 1
    %s2718 = scalar_lea.sflag [#allocation18], 1
    %2719 = vsyncpa %s2718, 1

</llo_original>
